<compile_context>
chip_gen: v6e
topology: v6e:2x2x1
jax: 0.10.0
libtpu: 0.0.40
codegen_flags: <defaults>
</compile_context>

<pallas_src>
import math
from functools import partial

import jax
import jax.numpy as jnp
from jax import lax
from jax.experimental import pallas as pl
from jax.experimental.pallas import tpu as pltpu


# ---------------------------------------------------------------------------
# helpers
# ---------------------------------------------------------------------------
def _pick_tile(dim, target, align):
    """Largest tile <= target that divides `dim` and is a multiple of `align`;
    falls back to the full dim (single block) if none exists."""
    if dim <= target:
        return dim
    t = (target // align) * align
    while t >= align:
        if dim % t == 0:
            return t
        t -= align
    return dim


# ---------------------------------------------------------------------------
# Pallas kernels
# ---------------------------------------------------------------------------
def _linear_kernel(x_ref, w_ref, b_ref, o_ref, acc_ref, *, activation):
    """Tiled y = x @ w + b with optional fused GELU. Reduction over grid axis 2."""
    @pl.when(pl.program_id(2) == 0)
    def _():
        acc_ref[...] = jnp.zeros_like(acc_ref)

    acc_ref[...] += jnp.dot(
        x_ref[...].astype(jnp.bfloat16),
        w_ref[...].astype(jnp.bfloat16),
        preferred_element_type=jnp.float32,
    )

    @pl.when(pl.program_id(2) == pl.num_programs(2) - 1)
    def _():
        y = acc_ref[...] + b_ref[...]
        if activation == "gelu":
            c = math.sqrt(2.0 / math.pi)
            y = 0.5 * y * (1.0 + jnp.tanh(c * (y + 0.044715 * y * y * y)))
        o_ref[...] = y.astype(o_ref.dtype)


def _matmul_residual_ln_kernel(x_ref, w_ref, b_ref, r_ref, g_ref, bb_ref,
                               o_ref, acc_ref):
    """Fused LayerNorm(residual + x @ w + b) * gamma + beta (eps=1e-6).
    Output N-tile spans the full d_model so the LN reduction is local."""
    @pl.when(pl.program_id(1) == 0)
    def _():
        acc_ref[...] = jnp.zeros_like(acc_ref)

    acc_ref[...] += jnp.dot(
        x_ref[...].astype(jnp.bfloat16),
        w_ref[...].astype(jnp.bfloat16),
        preferred_element_type=jnp.float32,
    )

    @pl.when(pl.program_id(1) == pl.num_programs(1) - 1)
    def _():
        y = acc_ref[...] + b_ref[...] + r_ref[...].astype(jnp.float32)
        mean = jnp.mean(y, axis=-1, keepdims=True)
        var = jnp.mean(jnp.square(y - mean), axis=-1, keepdims=True)
        inv = lax.rsqrt(var + 1e-6)
        o_ref[...] = ((y - mean) * inv * g_ref[...] + bb_ref[...]).astype(o_ref.dtype)


def _attention_kernel(qkv_ref, mask_ref, o_ref, *, heads, dk, scale):
    """All heads of one batch element per grid step.

    qkv_ref : (S, 3D) fused QKV slab, mask_ref : (1, S) key mask,
    o_ref   : (S, D) lane-dense context write (one store, not per-head)."""
    D = heads * dk
    qkv = qkv_ref[...].astype(jnp.float32)
    key_mask = mask_ref[...] > 0                       # (1, S) -> broadcast over rows
    outs = []
    for h in range(heads):                             # static unroll over heads
        q = qkv[:, h * dk:(h + 1) * dk] * scale
        k = qkv[:, D + h * dk:D + (h + 1) * dk]
        v = qkv[:, 2 * D + h * dk:2 * D + (h + 1) * dk]
        # contract last dims of q and k: no materialized K^T relayout
        s = lax.dot_general(
            q.astype(jnp.bfloat16), k.astype(jnp.bfloat16),
            dimension_numbers=(((1,), (1,)), ((), ())),
            preferred_element_type=jnp.float32,
        )
        s = jnp.where(key_mask, s, jnp.float32(-1e9))
        s = s - jnp.max(s, axis=-1, keepdims=True)     # also guards fully-masked rows
        p = jnp.exp(s)
        p = p * pl.reciprocal(jnp.sum(p, axis=-1, keepdims=True), approx=True)
        outs.append(jnp.dot(p.astype(jnp.bfloat16), v.astype(jnp.bfloat16),
                            preferred_element_type=jnp.float32))
    o_ref[...] = jnp.concatenate(outs, axis=-1).astype(o_ref.dtype)


# ---------------------------------------------------------------------------
# pallas_call wrappers
# ---------------------------------------------------------------------------
def linear(x2d, w, b, activation="none", tm=512, tn=512, tk=512):
    M, K = x2d.shape
    N = w.shape[1]
    tm = _pick_tile(M, tm, 8)
    tn = _pick_tile(N, tn, 128)
    tk = _pick_tile(K, tk, 128)
    grid = (M // tm, N // tn, K // tk)
    cost = pl.CostEstimate(
        flops=2 * M * N * K,
        transcendentals=(M * N if activation == "gelu" else 0),
        bytes_accessed=4 * (M * K + K * N + M * N + N),
    )
    return pl.pallas_call(
        partial(_linear_kernel, activation=activation),
        grid=grid,
        in_specs=[
            pl.BlockSpec((tm, tk), lambda i, j, k: (i, k)),
            pl.BlockSpec((tk, tn), lambda i, j, k: (k, j)),
            pl.BlockSpec((1, tn), lambda i, j, k: (0, j)),
        ],
        out_specs=pl.BlockSpec((tm, tn), lambda i, j, k: (i, j)),
        out_shape=jax.ShapeDtypeStruct((M, N), x2d.dtype),
        scratch_shapes=[pltpu.VMEM((tm, tn), jnp.float32)],
        compiler_params=pltpu.CompilerParams(
            dimension_semantics=("parallel", "parallel", "arbitrary")),
        cost_estimate=cost,
    )(x2d, w, b.reshape(1, N))


def matmul_residual_layernorm(x2d, w, b, residual, gamma, beta, tm=256, tk=512):
    """LayerNorm(residual + x2d @ w + b) — fused epilogue (no extra HBM round-trip)."""
    M, K = x2d.shape
    D = w.shape[1]
    tm = _pick_tile(M, tm, 8)
    tk = _pick_tile(K, tk, 128)
    grid = (M // tm, K // tk)
    cost = pl.CostEstimate(
        flops=2 * M * D * K + 10 * M * D,
        transcendentals=M,
        bytes_accessed=4 * (M * K + K * D + 2 * M * D + 3 * D),
    )
    return pl.pallas_call(
        _matmul_residual_ln_kernel,
        grid=grid,
        in_specs=[
            pl.BlockSpec((tm, tk), lambda i, k: (i, k)),
            pl.BlockSpec((tk, D), lambda i, k: (k, 0)),
            pl.BlockSpec((1, D), lambda i, k: (0, 0)),
            pl.BlockSpec((tm, D), lambda i, k: (i, 0)),
            pl.BlockSpec((1, D), lambda i, k: (0, 0)),
            pl.BlockSpec((1, D), lambda i, k: (0, 0)),
        ],
        out_specs=pl.BlockSpec((tm, D), lambda i, k: (i, 0)),
        out_shape=jax.ShapeDtypeStruct((M, D), x2d.dtype),
        scratch_shapes=[pltpu.VMEM((tm, D), jnp.float32)],
        compiler_params=pltpu.CompilerParams(
            dimension_semantics=("parallel", "arbitrary")),
        cost_estimate=cost,
    )(x2d, w, b.reshape(1, D), residual, gamma.reshape(1, D), beta.reshape(1, D))


def mha_attention(qkv, mask, heads, scale):
    """qkv: (B, S, 3D) fused QKV slab; mask: (B, S) key mask -> (B, S, D) context."""
    B, S, threeD = qkv.shape
    D = threeD // 3
    dk = D // heads
    mask3 = mask.astype(jnp.int32)[:, None, :]   # (B, 1, S) — tiny vs (B,1,S,S)
    cost = pl.CostEstimate(
        flops=4 * B * S * S * D,
        transcendentals=B * heads * S * S,
        bytes_accessed=4 * (B * S * threeD + B * S * D + B * S),
    )
    return pl.pallas_call(
        partial(_attention_kernel, heads=heads, dk=dk, scale=scale),
        grid=(B,),
        in_specs=[
            pl.BlockSpec((None, S, threeD), lambda b: (b, 0, 0)),
            pl.BlockSpec((None, 1, S), lambda b: (b, 0, 0)),
        ],
        out_specs=pl.BlockSpec((None, S, D), lambda b: (b, 0, 0)),
        out_shape=jax.ShapeDtypeStruct((B, S, D), qkv.dtype),
        compiler_params=pltpu.CompilerParams(dimension_semantics=("parallel",)),
        cost_estimate=cost,
    )(qkv, mask3)


# ---------------------------------------------------------------------------
# Model definition (parameter setup + glue in plain JAX)
# ---------------------------------------------------------------------------
def sinusoidal_pos_enc(max_len, d_model):
    pos = jnp.arange(max_len, dtype=jnp.float32)[:, None]
    i = jnp.arange(d_model, dtype=jnp.float32)[None, :]
    angle = pos / jnp.power(10000.0, (2.0 * jnp.floor(i / 2.0)) / d_model)
    pe = jnp.where((jnp.arange(d_model) % 2) == 0, jnp.sin(angle), jnp.cos(angle))
    return pe  # (max_len, d_model)


def init_params(key, n_layers, d_model, d_ff, max_len):
    params = {"pos_enc": sinusoidal_pos_enc(max_len, d_model), "layers": []}
    for _ in range(n_layers):
        keys = jax.random.split(key, 7)
        key = keys[0]
        wq = 0.02 * jax.random.normal(keys[1], (d_model, d_model), jnp.float32)
        wk = 0.02 * jax.random.normal(keys[2], (d_model, d_model), jnp.float32)
        wv = 0.02 * jax.random.normal(keys[3], (d_model, d_model), jnp.float32)
        layer = {
            # fused QKV projection weight/bias
            "w_qkv": jnp.concatenate([wq, wk, wv], axis=1),        # (D, 3D)
            "b_qkv": jnp.zeros((3 * d_model,), jnp.float32),
            "wo": 0.02 * jax.random.normal(keys[4], (d_model, d_model), jnp.float32),
            "bo": jnp.zeros((d_model,), jnp.float32),
            "w1": 0.02 * jax.random.normal(keys[5], (d_model, d_ff), jnp.float32),
            "b1": jnp.zeros((d_ff,), jnp.float32),
            "w2": 0.02 * jax.random.normal(keys[6], (d_ff, d_model), jnp.float32),
            "b2": jnp.zeros((d_model,), jnp.float32),
            "ln1_g": jnp.ones((d_model,), jnp.float32),
            "ln1_b": jnp.zeros((d_model,), jnp.float32),
            "ln2_g": jnp.ones((d_model,), jnp.float32),
            "ln2_b": jnp.zeros((d_model,), jnp.float32),
        }
        params["layers"].append(layer)
    return params


def bert_forward(params, bert_input, mask, heads):
    B, S, D = bert_input.shape
    dk = D // heads
    scale = 1.0 / math.sqrt(dk)

    # Total_Embed: add positional encoding (dropout = identity).
    x = bert_input + params["pos_enc"][None, :S, :]

    for layer in params["layers"]:
        x2d = x.reshape(B * S, D)

        # --- multi-head attention (fused QKV projection, no XLA transposes) ---
        qkv = linear(x2d, layer["w_qkv"], layer["b_qkv"])            # (B*S, 3D)
        ctx = mha_attention(qkv.reshape(B, S, 3 * D), mask, heads, scale)  # (B,S,D)
        # output projection + residual + LayerNorm, fused
        x2d = matmul_residual_layernorm(ctx.reshape(B * S, D), layer["wo"],
                                        layer["bo"], x2d,
                                        layer["ln1_g"], layer["ln1_b"])

        # --- feed-forward: w1+GELU fused, then w2 + residual + LayerNorm fused ---
        h = linear(x2d, layer["w1"], layer["b1"], activation="gelu")
        x2d = matmul_residual_layernorm(h, layer["w2"], layer["b2"], x2d,
                                        layer["ln2_g"], layer["ln2_b"])

        x = x2d.reshape(B, S, D)
    return x


# ---------------------------------------------------------------------------
# Main
# ---------------------------------------------------------------------------
if __name__ == "__main__":
    # Small-shape configuration consistent with BERT(heads, d_model, hidden, n_layers).
    B, S = 2, 8
    heads, d_model, hidden, n_layers = 4, 32, 16, 2
    d_ff = 4 * hidden  # 64

    key = jax.random.PRNGKey(0)
    k_param, k_in = jax.random.split(key)
    params = init_params(k_param, n_layers, d_model, d_ff, max_len=64)

    bert_input = jax.random.normal(k_in, (B, S, d_model), jnp.float32)
    mask = jnp.ones((B, S), jnp.int32).at[1, 6:].set(0)  # pad last 2 tokens of batch 1

    fwd = jax.jit(partial(bert_forward, heads=heads))
    out = fwd(params, bert_input, mask)
    out = jax.block_until_ready(out)

    assert out.shape == (B, S, d_model)
    assert bool(jnp.all(jnp.isfinite(out)))
    print("KERNEL_OK")
</pallas_src>

<mosaic_0001>
module attributes {stable_mosaic.version = 11 : i64} {
  func.func @_linear_kernel(%arg0: i32, %arg1: i32, %arg2: i32, %arg3: memref<16x32xf32, #tpu.memory_space<vmem>>, %arg4: memref<32x96xf32, #tpu.memory_space<vmem>>, %arg5: memref<1x96xf32, #tpu.memory_space<vmem>>, %arg6: memref<16x96xf32, #tpu.memory_space<vmem>>, %arg7: memref<16x96xf32, #tpu.memory_space<vmem>>) attributes {dimension_semantics = [#tpu.dimension_semantics<parallel>, #tpu.dimension_semantics<parallel>, #tpu.dimension_semantics<arbitrary>], iteration_bounds = array<i64: 1, 1, 1>, scalar_prefetch = 0 : i64, scratch_operands = 1 : i64, tpu.core_type = #tpu.core_type<tc>, window_params = [{transform_indices = @transform_0, window_bounds = array<i64: 16, 32>}, {transform_indices = @transform_1, window_bounds = array<i64: 32, 96>}, {transform_indices = @transform_2, window_bounds = array<i64: 1, 96>}, {transform_indices = @transform_3, window_bounds = array<i64: 16, 96>}]} {
    %c0_i32 = arith.constant 0 : i32
    %0 = arith.cmpi eq, %arg2, %c0_i32 : i32
    %1 = arith.extui %0 : i1 to i32
    %c0_i32_0 = arith.constant 0 : i32
    %2 = arith.cmpi ne, %1, %c0_i32_0 : i32
    scf.if %2 {
      %cst_10 = arith.constant 0.000000e+00 : f32
      %14 = vector.broadcast %cst_10 : f32 to vector<16x96xf32>
      %c0_11 = arith.constant 0 : index
      %c0_12 = arith.constant 0 : index
      %15 = vector.load %arg7[%c0_11, %c0_12] : memref<16x96xf32, #tpu.memory_space<vmem>>, vector<16x96xf32>
      tpu.vector_store %arg7[%c0_11, %c0_12], %14 {strides = array<i32>} : memref<16x96xf32, #tpu.memory_space<vmem>>, vector<16x96xf32>,
    } else {
    }
    %c0 = arith.constant 0 : index
    %c0_1 = arith.constant 0 : index
    %3 = vector.load %arg7[%c0, %c0_1] : memref<16x96xf32, #tpu.memory_space<vmem>>, vector<16x96xf32>
    %c0_2 = arith.constant 0 : index
    %c0_3 = arith.constant 0 : index
    %4 = vector.load %arg3[%c0_2, %c0_3] : memref<16x32xf32, #tpu.memory_space<vmem>>, vector<16x32xf32>
    %5 = arith.truncf %4 : vector<16x32xf32> to vector<16x32xbf16>
    %c0_4 = arith.constant 0 : index
    %c0_5 = arith.constant 0 : index
    %6 = vector.load %arg4[%c0_4, %c0_5] : memref<32x96xf32, #tpu.memory_space<vmem>>, vector<32x96xf32>
    %7 = arith.truncf %6 : vector<32x96xf32> to vector<32x96xbf16>
    %cst = arith.constant dense<0.000000e+00> : vector<16x96xf32>
    %8 = tpu.matmul %5, %7, %cst {dimension_numbers = #tpu.dot_dimension_numbers<[1], [0], [0], [1], [0, 0, 1, 1], [], []>} : vector<16x32xbf16>, vector<32x96xbf16>, vector<16x96xf32> -> vector<16x96xf32>
    %9 = arith.addf %3, %8 : vector<16x96xf32>
    %c0_6 = arith.constant 0 : index
    %c0_7 = arith.constant 0 : index
    %10 = vector.load %arg7[%c0_6, %c0_7] : memref<16x96xf32, #tpu.memory_space<vmem>>, vector<16x96xf32>
    tpu.vector_store %arg7[%c0_6, %c0_7], %9 {strides = array<i32>} : memref<16x96xf32, #tpu.memory_space<vmem>>, vector<16x96xf32>,
    %c0_i32_8 = arith.constant 0 : i32
    %11 = arith.cmpi eq, %arg2, %c0_i32_8 : i32
    %12 = arith.extui %11 : i1 to i32
    %c0_i32_9 = arith.constant 0 : i32
    %13 = arith.cmpi ne, %12, %c0_i32_9 : i32
    scf.if %13 {
      %c0_10 = arith.constant 0 : index
      %c0_11 = arith.constant 0 : index
      %14 = vector.load %arg7[%c0_10, %c0_11] : memref<16x96xf32, #tpu.memory_space<vmem>>, vector<16x96xf32>
      %c0_12 = arith.constant 0 : index
      %c0_13 = arith.constant 0 : index
      %15 = vector.load %arg5[%c0_12, %c0_13] : memref<1x96xf32, #tpu.memory_space<vmem>>, vector<1x96xf32>
      %16 = vector.broadcast %15 : vector<1x96xf32> to vector<16x96xf32>
      %17 = arith.addf %14, %16 : vector<16x96xf32>
      %c0_14 = arith.constant 0 : index
      %c0_15 = arith.constant 0 : index
      %18 = vector.load %arg6[%c0_14, %c0_15] : memref<16x96xf32, #tpu.memory_space<vmem>>, vector<16x96xf32>
      tpu.vector_store %arg6[%c0_14, %c0_15], %17 {strides = array<i32>} : memref<16x96xf32, #tpu.memory_space<vmem>>, vector<16x96xf32>,
    } else {
    }
    return
  }
  func.func @transform_0(%arg0: i32, %arg1: i32, %arg2: i32) -> (i32, i32) {
    %c0_i32 = arith.constant 0 : i32
    return %arg0, %arg2 : i32, i32
  }
  func.func @transform_1(%arg0: i32, %arg1: i32, %arg2: i32) -> (i32, i32) {
    %c0_i32 = arith.constant 0 : i32
    return %arg2, %arg1 : i32, i32
  }
  func.func @transform_2(%arg0: i32, %arg1: i32, %arg2: i32) -> (i32, i32) {
    %c0_i32 = arith.constant 0 : i32
    %c0_i32_0 = arith.constant 0 : i32
    return %c0_i32, %arg1 : i32, i32
  }
  func.func @transform_3(%arg0: i32, %arg1: i32, %arg2: i32) -> (i32, i32) {
    %c0_i32 = arith.constant 0 : i32
    return %arg0, %arg1 : i32, i32
  }
}

module attributes {stable_mosaic.version = 11 : i64} {
  func.func @_attention_kernel(%arg0: i32, %arg1: memref<1x8x96xf32, #tpu.memory_space<vmem>>, %arg2: memref<1x1x8xi32, #tpu.memory_space<vmem>>, %arg3: memref<1x8x32xf32, #tpu.memory_space<vmem>>) attributes {dimension_semantics = [#tpu.dimension_semantics<parallel>], iteration_bounds = array<i64: 2>, scalar_prefetch = 0 : i64, scratch_operands = 0 : i64, tpu.core_type = #tpu.core_type<tc>, window_params = [{transform_indices = @transform_0, window_bounds = array<i64: 1, 8, 96>}, {transform_indices = @transform_1, window_bounds = array<i64: 1, 1, 8>}, {transform_indices = @transform_2, window_bounds = array<i64: 1, 8, 32>}]} {
    %c0 = arith.constant 0 : index
    %c0_0 = arith.constant 0 : index
    %c0_1 = arith.constant 0 : index
    %0 = vector.load %arg1[%c0, %c0_0, %c0_1] : memref<1x8x96xf32, #tpu.memory_space<vmem>>, vector<1x8x96xf32>
    %1 = vector.shape_cast %0 : vector<1x8x96xf32> to vector<8x96xf32>
    %c0_2 = arith.constant 0 : index
    %c0_3 = arith.constant 0 : index
    %c0_4 = arith.constant 0 : index
    %2 = vector.load %arg2[%c0_2, %c0_3, %c0_4] : memref<1x1x8xi32, #tpu.memory_space<vmem>>, vector<1x1x8xi32>
    %3 = vector.shape_cast %2 : vector<1x1x8xi32> to vector<1x8xi32>
    %c0_i32 = arith.constant 0 : i32
    %4 = vector.broadcast %c0_i32 : i32 to vector<1x8xi32>
    %5 = arith.cmpi sgt, %3, %4 : vector<1x8xi32>
    %6 = vector.extract_strided_slice %1 {offsets = [0, 0], sizes = [8, 8], strides = [1, 1]} : vector<8x96xf32> to vector<8x8xf32>
    %cst = arith.constant 0.353553385 : f32
    %7 = vector.broadcast %cst : f32 to vector<8x8xf32>
    %8 = arith.mulf %6, %7 : vector<8x8xf32>
    %9 = vector.extract_strided_slice %1 {offsets = [0, 32], sizes = [8, 8], strides = [1, 1]} : vector<8x96xf32> to vector<8x8xf32>
    %10 = vector.extract_strided_slice %1 {offsets = [0, 64], sizes = [8, 8], strides = [1, 1]} : vector<8x96xf32> to vector<8x8xf32>
    %11 = arith.truncf %8 : vector<8x8xf32> to vector<8x8xbf16>
    %12 = arith.truncf %9 : vector<8x8xf32> to vector<8x8xbf16>
    %cst_5 = arith.constant dense<0.000000e+00> : vector<8x8xf32>
    %13 = tpu.matmul %11, %12, %cst_5 {dimension_numbers = #tpu.dot_dimension_numbers<[1], [1], [0], [0], [0, 0, 1, 0], [], []>} : vector<8x8xbf16>, vector<8x8xbf16>, vector<8x8xf32> -> vector<8x8xf32>
    %cst_6 = arith.constant -1.000000e+09 : f32
    %14 = vector.shape_cast %5 : vector<1x8xi1> to vector<1x8xi1>
    %15 = vector.broadcast %14 : vector<1x8xi1> to vector<8x8xi1>
    %16 = vector.broadcast %cst_6 : f32 to vector<8x8xf32>
    %17 = arith.select %15, %13, %16 : vector<8x8xi1>, vector<8x8xf32>
    %cst_7 = arith.constant dense<0xFF800000> : vector<8xf32>
    %18 = vector.multi_reduction <maximumf>, %17, %cst_7 [1] : vector<8x8xf32> to vector<8xf32>
    %19 = vector.shape_cast %18 : vector<8xf32> to vector<8x1xf32>
    %20 = vector.broadcast %19 : vector<8x1xf32> to vector<8x8xf32>
    %21 = arith.subf %17, %20 : vector<8x8xf32>
    %22 = math.exp %21 : vector<8x8xf32>
    %cst_8 = arith.constant dense<0.000000e+00> : vector<8xf32>
    %23 = vector.multi_reduction <add>, %22, %cst_8 [1] : vector<8x8xf32> to vector<8xf32>
    %24 = vector.shape_cast %23 : vector<8xf32> to vector<8x1xf32>
    %25 = tpu.reciprocal %24 {approx = true} : vector<8x1xf32> -> vector<8x1xf32>
    %26 = vector.broadcast %25 : vector<8x1xf32> to vector<8x8xf32>
    %27 = arith.mulf %22, %26 : vector<8x8xf32>
    %28 = arith.truncf %27 : vector<8x8xf32> to vector<8x8xbf16>
    %29 = arith.truncf %10 : vector<8x8xf32> to vector<8x8xbf16>
    %cst_9 = arith.constant dense<0.000000e+00> : vector<8x8xf32>
    %30 = tpu.matmul %28, %29, %cst_9 {dimension_numbers = #tpu.dot_dimension_numbers<[1], [0], [0], [1], [0, 0, 1, 1], [], []>} : vector<8x8xbf16>, vector<8x8xbf16>, vector<8x8xf32> -> vector<8x8xf32>
    %31 = vector.extract_strided_slice %1 {offsets = [0, 8], sizes = [8, 8], strides = [1, 1]} : vector<8x96xf32> to vector<8x8xf32>
    %cst_10 = arith.constant 0.353553385 : f32
    %32 = vector.broadcast %cst_10 : f32 to vector<8x8xf32>
    %33 = arith.mulf %31, %32 : vector<8x8xf32>
    %34 = vector.extract_strided_slice %1 {offsets = [0, 40], sizes = [8, 8], strides = [1, 1]} : vector<8x96xf32> to vector<8x8xf32>
    %35 = vector.extract_strided_slice %1 {offsets = [0, 72], sizes = [8, 8], strides = [1, 1]} : vector<8x96xf32> to vector<8x8xf32>
    %36 = arith.truncf %33 : vector<8x8xf32> to vector<8x8xbf16>
    %37 = arith.truncf %34 : vector<8x8xf32> to vector<8x8xbf16>
    %cst_11 = arith.constant dense<0.000000e+00> : vector<8x8xf32>
    %38 = tpu.matmul %36, %37, %cst_11 {dimension_numbers = #tpu.dot_dimension_numbers<[1], [1], [0], [0], [0, 0, 1, 0], [], []>} : vector<8x8xbf16>, vector<8x8xbf16>, vector<8x8xf32> -> vector<8x8xf32>
    %cst_12 = arith.constant -1.000000e+09 : f32
    %39 = vector.shape_cast %5 : vector<1x8xi1> to vector<1x8xi1>
    %40 = vector.broadcast %39 : vector<1x8xi1> to vector<8x8xi1>
    %41 = vector.broadcast %cst_12 : f32 to vector<8x8xf32>
    %42 = arith.select %40, %38, %41 : vector<8x8xi1>, vector<8x8xf32>
    %cst_13 = arith.constant dense<0xFF800000> : vector<8xf32>
    %43 = vector.multi_reduction <maximumf>, %42, %cst_13 [1] : vector<8x8xf32> to vector<8xf32>
    %44 = vector.shape_cast %43 : vector<8xf32> to vector<8x1xf32>
    %45 = vector.broadcast %44 : vector<8x1xf32> to vector<8x8xf32>
    %46 = arith.subf %42, %45 : vector<8x8xf32>
    %47 = math.exp %46 : vector<8x8xf32>
    %cst_14 = arith.constant dense<0.000000e+00> : vector<8xf32>
    %48 = vector.multi_reduction <add>, %47, %cst_14 [1] : vector<8x8xf32> to vector<8xf32>
    %49 = vector.shape_cast %48 : vector<8xf32> to vector<8x1xf32>
    %50 = tpu.reciprocal %49 {approx = true} : vector<8x1xf32> -> vector<8x1xf32>
    %51 = vector.broadcast %50 : vector<8x1xf32> to vector<8x8xf32>
    %52 = arith.mulf %47, %51 : vector<8x8xf32>
    %53 = arith.truncf %52 : vector<8x8xf32> to vector<8x8xbf16>
    %54 = arith.truncf %35 : vector<8x8xf32> to vector<8x8xbf16>
    %cst_15 = arith.constant dense<0.000000e+00> : vector<8x8xf32>
    %55 = tpu.matmul %53, %54, %cst_15 {dimension_numbers = #tpu.dot_dimension_numbers<[1], [0], [0], [1], [0, 0, 1, 1], [], []>} : vector<8x8xbf16>, vector<8x8xbf16>, vector<8x8xf32> -> vector<8x8xf32>
    %56 = vector.extract_strided_slice %1 {offsets = [0, 16], sizes = [8, 8], strides = [1, 1]} : vector<8x96xf32> to vector<8x8xf32>
    %cst_16 = arith.constant 0.353553385 : f32
    %57 = vector.broadcast %cst_16 : f32 to vector<8x8xf32>
    %58 = arith.mulf %56, %57 : vector<8x8xf32>
    %59 = vector.extract_strided_slice %1 {offsets = [0, 48], sizes = [8, 8], strides = [1, 1]} : vector<8x96xf32> to vector<8x8xf32>
    %60 = vector.extract_strided_slice %1 {offsets = [0, 80], sizes = [8, 8], strides = [1, 1]} : vector<8x96xf32> to vector<8x8xf32>
    %61 = arith.truncf %58 : vector<8x8xf32> to vector<8x8xbf16>
    %62 = arith.truncf %59 : vector<8x8xf32> to vector<8x8xbf16>
    %cst_17 = arith.constant dense<0.000000e+00> : vector<8x8xf32>
    %63 = tpu.matmul %61, %62, %cst_17 {dimension_numbers = #tpu.dot_dimension_numbers<[1], [1], [0], [0], [0, 0, 1, 0], [], []>} : vector<8x8xbf16>, vector<8x8xbf16>, vector<8x8xf32> -> vector<8x8xf32>
    %cst_18 = arith.constant -1.000000e+09 : f32
    %64 = vector.shape_cast %5 : vector<1x8xi1> to vector<1x8xi1>
    %65 = vector.broadcast %64 : vector<1x8xi1> to vector<8x8xi1>
    %66 = vector.broadcast %cst_18 : f32 to vector<8x8xf32>
    %67 = arith.select %65, %63, %66 : vector<8x8xi1>, vector<8x8xf32>
    %cst_19 = arith.constant dense<0xFF800000> : vector<8xf32>
    %68 = vector.multi_reduction <maximumf>, %67, %cst_19 [1] : vector<8x8xf32> to vector<8xf32>
    %69 = vector.shape_cast %68 : vector<8xf32> to vector<8x1xf32>
    %70 = vector.broadcast %69 : vector<8x1xf32> to vector<8x8xf32>
    %71 = arith.subf %67, %70 : vector<8x8xf32>
    %72 = math.exp %71 : vector<8x8xf32>
    %cst_20 = arith.constant dense<0.000000e+00> : vector<8xf32>
    %73 = vector.multi_reduction <add>, %72, %cst_20 [1] : vector<8x8xf32> to vector<8xf32>
    %74 = vector.shape_cast %73 : vector<8xf32> to vector<8x1xf32>
    %75 = tpu.reciprocal %74 {approx = true} : vector<8x1xf32> -> vector<8x1xf32>
    %76 = vector.broadcast %75 : vector<8x1xf32> to vector<8x8xf32>
    %77 = arith.mulf %72, %76 : vector<8x8xf32>
    %78 = arith.truncf %77 : vector<8x8xf32> to vector<8x8xbf16>
    %79 = arith.truncf %60 : vector<8x8xf32> to vector<8x8xbf16>
    %cst_21 = arith.constant dense<0.000000e+00> : vector<8x8xf32>
    %80 = tpu.matmul %78, %79, %cst_21 {dimension_numbers = #tpu.dot_dimension_numbers<[1], [0], [0], [1], [0, 0, 1, 1], [], []>} : vector<8x8xbf16>, vector<8x8xbf16>, vector<8x8xf32> -> vector<8x8xf32>
    %81 = vector.extract_strided_slice %1 {offsets = [0, 24], sizes = [8, 8], strides = [1, 1]} : vector<8x96xf32> to vector<8x8xf32>
    %cst_22 = arith.constant 0.353553385 : f32
    %82 = vector.broadcast %cst_22 : f32 to vector<8x8xf32>
    %83 = arith.mulf %81, %82 : vector<8x8xf32>
    %84 = vector.extract_strided_slice %1 {offsets = [0, 56], sizes = [8, 8], strides = [1, 1]} : vector<8x96xf32> to vector<8x8xf32>
    %85 = vector.extract_strided_slice %1 {offsets = [0, 88], sizes = [8, 8], strides = [1, 1]} : vector<8x96xf32> to vector<8x8xf32>
    %86 = arith.truncf %83 : vector<8x8xf32> to vector<8x8xbf16>
    %87 = arith.truncf %84 : vector<8x8xf32> to vector<8x8xbf16>
    %cst_23 = arith.constant dense<0.000000e+00> : vector<8x8xf32>
    %88 = tpu.matmul %86, %87, %cst_23 {dimension_numbers = #tpu.dot_dimension_numbers<[1], [1], [0], [0], [0, 0, 1, 0], [], []>} : vector<8x8xbf16>, vector<8x8xbf16>, vector<8x8xf32> -> vector<8x8xf32>
    %cst_24 = arith.constant -1.000000e+09 : f32
    %89 = vector.shape_cast %5 : vector<1x8xi1> to vector<1x8xi1>
    %90 = vector.broadcast %89 : vector<1x8xi1> to vector<8x8xi1>
    %91 = vector.broadcast %cst_24 : f32 to vector<8x8xf32>
    %92 = arith.select %90, %88, %91 : vector<8x8xi1>, vector<8x8xf32>
    %cst_25 = arith.constant dense<0xFF800000> : vector<8xf32>
    %93 = vector.multi_reduction <maximumf>, %92, %cst_25 [1] : vector<8x8xf32> to vector<8xf32>
    %94 = vector.shape_cast %93 : vector<8xf32> to vector<8x1xf32>
    %95 = vector.broadcast %94 : vector<8x1xf32> to vector<8x8xf32>
    %96 = arith.subf %92, %95 : vector<8x8xf32>
    %97 = math.exp %96 : vector<8x8xf32>
    %cst_26 = arith.constant dense<0.000000e+00> : vector<8xf32>
    %98 = vector.multi_reduction <add>, %97, %cst_26 [1] : vector<8x8xf32> to vector<8xf32>
    %99 = vector.shape_cast %98 : vector<8xf32> to vector<8x1xf32>
    %100 = tpu.reciprocal %99 {approx = true} : vector<8x1xf32> -> vector<8x1xf32>
    %101 = vector.broadcast %100 : vector<8x1xf32> to vector<8x8xf32>
    %102 = arith.mulf %97, %101 : vector<8x8xf32>
    %103 = arith.truncf %102 : vector<8x8xf32> to vector<8x8xbf16>
    %104 = arith.truncf %85 : vector<8x8xf32> to vector<8x8xbf16>
    %cst_27 = arith.constant dense<0.000000e+00> : vector<8x8xf32>
    %105 = tpu.matmul %103, %104, %cst_27 {dimension_numbers = #tpu.dot_dimension_numbers<[1], [0], [0], [1], [0, 0, 1, 1], [], []>} : vector<8x8xbf16>, vector<8x8xbf16>, vector<8x8xf32> -> vector<8x8xf32>
    %106 = tpu.concatenate %30, %55, %80, %105 in 1 : vector<8x8xf32>, vector<8x8xf32>, vector<8x8xf32>, vector<8x8xf32> -> vector<8x32xf32>
    %c0_28 = arith.constant 0 : index
    %c0_29 = arith.constant 0 : index
    %c0_30 = arith.constant 0 : index
    %107 = vector.load %arg3[%c0_28, %c0_29, %c0_30] : memref<1x8x32xf32, #tpu.memory_space<vmem>>, vector<1x8x32xf32>
    %108 = vector.shape_cast %107 : vector<1x8x32xf32> to vector<8x32xf32>
    %109 = vector.shape_cast %106 : vector<8x32xf32> to vector<1x8x32xf32>
    tpu.vector_store %arg3[%c0_28, %c0_29, %c0_30], %109 {strides = array<i32>} : memref<1x8x32xf32, #tpu.memory_space<vmem>>, vector<1x8x32xf32>,
    return
  }
  func.func @transform_0(%arg0: i32) -> (i32, i32, i32) {
    %c0_i32 = arith.constant 0 : i32
    %c0_i32_0 = arith.constant 0 : i32
    %c0_i32_1 = arith.constant 0 : i32
    return %arg0, %c0_i32, %c0_i32_0 : i32, i32, i32
  }
  func.func @transform_1(%arg0: i32) -> (i32, i32, i32) {
    %c0_i32 = arith.constant 0 : i32
    %c0_i32_0 = arith.constant 0 : i32
    %c0_i32_1 = arith.constant 0 : i32
    return %arg0, %c0_i32, %c0_i32_0 : i32, i32, i32
  }
  func.func @transform_2(%arg0: i32) -> (i32, i32, i32) {
    %c0_i32 = arith.constant 0 : i32
    %c0_i32_0 = arith.constant 0 : i32
    %c0_i32_1 = arith.constant 0 : i32
    return %arg0, %c0_i32, %c0_i32_0 : i32, i32, i32
  }
}

module attributes {stable_mosaic.version = 11 : i64} {
  func.func @_matmul_residual_ln_kernel(%arg0: i32, %arg1: i32, %arg2: memref<16x32xf32, #tpu.memory_space<vmem>>, %arg3: memref<32x32xf32, #tpu.memory_space<vmem>>, %arg4: memref<1x32xf32, #tpu.memory_space<vmem>>, %arg5: memref<16x32xf32, #tpu.memory_space<vmem>>, %arg6: memref<1x32xf32, #tpu.memory_space<vmem>>, %arg7: memref<1x32xf32, #tpu.memory_space<vmem>>, %arg8: memref<16x32xf32, #tpu.memory_space<vmem>>, %arg9: memref<16x32xf32, #tpu.memory_space<vmem>>) attributes {dimension_semantics = [#tpu.dimension_semantics<parallel>, #tpu.dimension_semantics<arbitrary>], iteration_bounds = array<i64: 1, 1>, scalar_prefetch = 0 : i64, scratch_operands = 1 : i64, tpu.core_type = #tpu.core_type<tc>, window_params = [{transform_indices = @transform_0, window_bounds = array<i64: 16, 32>}, {transform_indices = @transform_1, window_bounds = array<i64: 32, 32>}, {pipeline_mode = #tpu.pipeline_mode<synchronous>, transform_indices = @transform_2, window_bounds = array<i64: 1, 32>}, {transform_indices = @transform_3, window_bounds = array<i64: 16, 32>}, {pipeline_mode = #tpu.pipeline_mode<synchronous>, transform_indices = @transform_4, window_bounds = array<i64: 1, 32>}, {pipeline_mode = #tpu.pipeline_mode<synchronous>, transform_indices = @transform_5, window_bounds = array<i64: 1, 32>}, {transform_indices = @transform_6, window_bounds = array<i64: 16, 32>}]} {
    %c0_i32 = arith.constant 0 : i32
    %0 = arith.cmpi eq, %arg1, %c0_i32 : i32
    %1 = arith.extui %0 : i1 to i32
    %c0_i32_0 = arith.constant 0 : i32
    %2 = arith.cmpi ne, %1, %c0_i32_0 : i32
    scf.if %2 {
      %cst_10 = arith.constant 0.000000e+00 : f32
      %14 = vector.broadcast %cst_10 : f32 to vector<16x32xf32>
      %c0_11 = arith.constant 0 : index
      %c0_12 = arith.constant 0 : index
      %15 = vector.load %arg9[%c0_11, %c0_12] : memref<16x32xf32, #tpu.memory_space<vmem>>, vector<16x32xf32>
      tpu.vector_store %arg9[%c0_11, %c0_12], %14 {strides = array<i32>} : memref<16x32xf32, #tpu.memory_space<vmem>>, vector<16x32xf32>,
    } else {
    }
    %c0 = arith.constant 0 : index
    %c0_1 = arith.constant 0 : index
    %3 = vector.load %arg9[%c0, %c0_1] : memref<16x32xf32, #tpu.memory_space<vmem>>, vector<16x32xf32>
    %c0_2 = arith.constant 0 : index
    %c0_3 = arith.constant 0 : index
    %4 = vector.load %arg2[%c0_2, %c0_3] : memref<16x32xf32, #tpu.memory_space<vmem>>, vector<16x32xf32>
    %5 = arith.truncf %4 : vector<16x32xf32> to vector<16x32xbf16>
    %c0_4 = arith.constant 0 : index
    %c0_5 = arith.constant 0 : index
    %6 = vector.load %arg3[%c0_4, %c0_5] : memref<32x32xf32, #tpu.memory_space<vmem>>, vector<32x32xf32>
    %7 = arith.truncf %6 : vector<32x32xf32> to vector<32x32xbf16>
    %cst = arith.constant dense<0.000000e+00> : vector<16x32xf32>
    %8 = tpu.matmul %5, %7, %cst {dimension_numbers = #tpu.dot_dimension_numbers<[1], [0], [0], [1], [0, 0, 1, 1], [], []>} : vector<16x32xbf16>, vector<32x32xbf16>, vector<16x32xf32> -> vector<16x32xf32>
    %9 = arith.addf %3, %8 : vector<16x32xf32>
    %c0_6 = arith.constant 0 : index
    %c0_7 = arith.constant 0 : index
    %10 = vector.load %arg9[%c0_6, %c0_7] : memref<16x32xf32, #tpu.memory_space<vmem>>, vector<16x32xf32>
    tpu.vector_store %arg9[%c0_6, %c0_7], %9 {strides = array<i32>} : memref<16x32xf32, #tpu.memory_space<vmem>>, vector<16x32xf32>,
    %c0_i32_8 = arith.constant 0 : i32
    %11 = arith.cmpi eq, %arg1, %c0_i32_8 : i32
    %12 = arith.extui %11 : i1 to i32
    %c0_i32_9 = arith.constant 0 : i32
    %13 = arith.cmpi ne, %12, %c0_i32_9 : i32
    scf.if %13 {
      %c0_10 = arith.constant 0 : index
      %c0_11 = arith.constant 0 : index
      %14 = vector.load %arg9[%c0_10, %c0_11] : memref<16x32xf32, #tpu.memory_space<vmem>>, vector<16x32xf32>
      %c0_12 = arith.constant 0 : index
      %c0_13 = arith.constant 0 : index
      %15 = vector.load %arg4[%c0_12, %c0_13] : memref<1x32xf32, #tpu.memory_space<vmem>>, vector<1x32xf32>
      %16 = vector.broadcast %15 : vector<1x32xf32> to vector<16x32xf32>
      %17 = arith.addf %14, %16 : vector<16x32xf32>
      %c0_14 = arith.constant 0 : index
      %c0_15 = arith.constant 0 : index
      %18 = vector.load %arg5[%c0_14, %c0_15] : memref<16x32xf32, #tpu.memory_space<vmem>>, vector<16x32xf32>
      %19 = arith.addf %17, %18 : vector<16x32xf32>
      %cst_16 = arith.constant dense<0.000000e+00> : vector<16xf32>
      %20 = vector.multi_reduction <add>, %19, %cst_16 [1] : vector<16x32xf32> to vector<16xf32>
      %21 = vector.shape_cast %20 : vector<16xf32> to vector<16x1xf32>
      %cst_17 = arith.constant 3.200000e+01 : f32
      %22 = vector.broadcast %cst_17 : f32 to vector<16x1xf32>
      %23 = arith.divf %21, %22 : vector<16x1xf32>
      %24 = vector.broadcast %23 : vector<16x1xf32> to vector<16x32xf32>
      %25 = arith.subf %19, %24 : vector<16x32xf32>
      %26 = arith.mulf %25, %25 : vector<16x32xf32>
      %cst_18 = arith.constant dense<0.000000e+00> : vector<16xf32>
      %27 = vector.multi_reduction <add>, %26, %cst_18 [1] : vector<16x32xf32> to vector<16xf32>
      %28 = vector.shape_cast %27 : vector<16xf32> to vector<16x1xf32>
      %cst_19 = arith.constant 3.200000e+01 : f32
      %29 = vector.broadcast %cst_19 : f32 to vector<16x1xf32>
      %30 = arith.divf %28, %29 : vector<16x1xf32>
      %cst_20 = arith.constant 9.99999997E-7 : f32
      %31 = vector.broadcast %cst_20 : f32 to vector<16x1xf32>
      %32 = arith.addf %30, %31 : vector<16x1xf32>
      %33 = math.rsqrt %32 : vector<16x1xf32>
      %34 = vector.broadcast %23 : vector<16x1xf32> to vector<16x32xf32>
      %35 = arith.subf %19, %34 : vector<16x32xf32>
      %36 = vector.broadcast %33 : vector<16x1xf32> to vector<16x32xf32>
      %37 = arith.mulf %35, %36 : vector<16x32xf32>
      %c0_21 = arith.constant 0 : index
      %c0_22 = arith.constant 0 : index
      %38 = vector.load %arg6[%c0_21, %c0_22] : memref<1x32xf32, #tpu.memory_space<vmem>>, vector<1x32xf32>
      %39 = vector.broadcast %38 : vector<1x32xf32> to vector<16x32xf32>
      %40 = arith.mulf %37, %39 : vector<16x32xf32>
      %c0_23 = arith.constant 0 : index
      %c0_24 = arith.constant 0 : index
      %41 = vector.load %arg7[%c0_23, %c0_24] : memref<1x32xf32, #tpu.memory_space<vmem>>, vector<1x32xf32>
      %42 = vector.broadcast %41 : vector<1x32xf32> to vector<16x32xf32>
      %43 = arith.addf %40, %42 : vector<16x32xf32>
      %c0_25 = arith.constant 0 : index
      %c0_26 = arith.constant 0 : index
      %44 = vector.load %arg8[%c0_25, %c0_26] : memref<16x32xf32, #tpu.memory_space<vmem>>, vector<16x32xf32>
      tpu.vector_store %arg8[%c0_25, %c0_26], %43 {strides = array<i32>} : memref<16x32xf32, #tpu.memory_space<vmem>>, vector<16x32xf32>,
    } else {
    }
    return
  }
  func.func @transform_0(%arg0: i32, %arg1: i32) -> (i32, i32) {
    %c0_i32 = arith.constant 0 : i32
    return %arg0, %arg1 : i32, i32
  }
  func.func @transform_1(%arg0: i32, %arg1: i32) -> (i32, i32) {
    %c0_i32 = arith.constant 0 : i32
    %c0_i32_0 = arith.constant 0 : i32
    return %arg1, %c0_i32 : i32, i32
  }
  func.func @transform_2(%arg0: i32, %arg1: i32) -> (i32, i32) {
    %c0_i32 = arith.constant 0 : i32
    %c0_i32_0 = arith.constant 0 : i32
    %c0_i32_1 = arith.constant 0 : i32
    return %c0_i32, %c0_i32_0 : i32, i32
  }
  func.func @transform_3(%arg0: i32, %arg1: i32) -> (i32, i32) {
    %c0_i32 = arith.constant 0 : i32
    %c0_i32_0 = arith.constant 0 : i32
    return %arg0, %c0_i32 : i32, i32
  }
  func.func @transform_4(%arg0: i32, %arg1: i32) -> (i32, i32) {
    %c0_i32 = arith.constant 0 : i32
    %c0_i32_0 = arith.constant 0 : i32
    %c0_i32_1 = arith.constant 0 : i32
    return %c0_i32, %c0_i32_0 : i32, i32
  }
  func.func @transform_5(%arg0: i32, %arg1: i32) -> (i32, i32) {
    %c0_i32 = arith.constant 0 : i32
    %c0_i32_0 = arith.constant 0 : i32
    %c0_i32_1 = arith.constant 0 : i32
    return %c0_i32, %c0_i32_0 : i32, i32
  }
  func.func @transform_6(%arg0: i32, %arg1: i32) -> (i32, i32) {
    %c0_i32 = arith.constant 0 : i32
    %c0_i32_0 = arith.constant 0 : i32
    return %arg0, %c0_i32 : i32, i32
  }
}

module attributes {stable_mosaic.version = 11 : i64} {
  func.func @_linear_kernel(%arg0: i32, %arg1: i32, %arg2: i32, %arg3: memref<16x32xf32, #tpu.memory_space<vmem>>, %arg4: memref<32x64xf32, #tpu.memory_space<vmem>>, %arg5: memref<1x64xf32, #tpu.memory_space<vmem>>, %arg6: memref<16x64xf32, #tpu.memory_space<vmem>>, %arg7: memref<16x64xf32, #tpu.memory_space<vmem>>) attributes {dimension_semantics = [#tpu.dimension_semantics<parallel>, #tpu.dimension_semantics<parallel>, #tpu.dimension_semantics<arbitrary>], iteration_bounds = array<i64: 1, 1, 1>, scalar_prefetch = 0 : i64, scratch_operands = 1 : i64, tpu.core_type = #tpu.core_type<tc>, window_params = [{transform_indices = @transform_0, window_bounds = array<i64: 16, 32>}, {transform_indices = @transform_1, window_bounds = array<i64: 32, 64>}, {transform_indices = @transform_2, window_bounds = array<i64: 1, 64>}, {transform_indices = @transform_3, window_bounds = array<i64: 16, 64>}]} {
    %c0_i32 = arith.constant 0 : i32
    %0 = arith.cmpi eq, %arg2, %c0_i32 : i32
    %1 = arith.extui %0 : i1 to i32
    %c0_i32_0 = arith.constant 0 : i32
    %2 = arith.cmpi ne, %1, %c0_i32_0 : i32
    scf.if %2 {
      %cst_10 = arith.constant 0.000000e+00 : f32
      %14 = vector.broadcast %cst_10 : f32 to vector<16x64xf32>
      %c0_11 = arith.constant 0 : index
      %c0_12 = arith.constant 0 : index
      %15 = vector.load %arg7[%c0_11, %c0_12] : memref<16x64xf32, #tpu.memory_space<vmem>>, vector<16x64xf32>
      tpu.vector_store %arg7[%c0_11, %c0_12], %14 {strides = array<i32>} : memref<16x64xf32, #tpu.memory_space<vmem>>, vector<16x64xf32>,
    } else {
    }
    %c0 = arith.constant 0 : index
    %c0_1 = arith.constant 0 : index
    %3 = vector.load %arg7[%c0, %c0_1] : memref<16x64xf32, #tpu.memory_space<vmem>>, vector<16x64xf32>
    %c0_2 = arith.constant 0 : index
    %c0_3 = arith.constant 0 : index
    %4 = vector.load %arg3[%c0_2, %c0_3] : memref<16x32xf32, #tpu.memory_space<vmem>>, vector<16x32xf32>
    %5 = arith.truncf %4 : vector<16x32xf32> to vector<16x32xbf16>
    %c0_4 = arith.constant 0 : index
    %c0_5 = arith.constant 0 : index
    %6 = vector.load %arg4[%c0_4, %c0_5] : memref<32x64xf32, #tpu.memory_space<vmem>>, vector<32x64xf32>
    %7 = arith.truncf %6 : vector<32x64xf32> to vector<32x64xbf16>
    %cst = arith.constant dense<0.000000e+00> : vector<16x64xf32>
    %8 = tpu.matmul %5, %7, %cst {dimension_numbers = #tpu.dot_dimension_numbers<[1], [0], [0], [1], [0, 0, 1, 1], [], []>} : vector<16x32xbf16>, vector<32x64xbf16>, vector<16x64xf32> -> vector<16x64xf32>
    %9 = arith.addf %3, %8 : vector<16x64xf32>
    %c0_6 = arith.constant 0 : index
    %c0_7 = arith.constant 0 : index
    %10 = vector.load %arg7[%c0_6, %c0_7] : memref<16x64xf32, #tpu.memory_space<vmem>>, vector<16x64xf32>
    tpu.vector_store %arg7[%c0_6, %c0_7], %9 {strides = array<i32>} : memref<16x64xf32, #tpu.memory_space<vmem>>, vector<16x64xf32>,
    %c0_i32_8 = arith.constant 0 : i32
    %11 = arith.cmpi eq, %arg2, %c0_i32_8 : i32
    %12 = arith.extui %11 : i1 to i32
    %c0_i32_9 = arith.constant 0 : i32
    %13 = arith.cmpi ne, %12, %c0_i32_9 : i32
    scf.if %13 {
      %c0_10 = arith.constant 0 : index
      %c0_11 = arith.constant 0 : index
      %14 = vector.load %arg7[%c0_10, %c0_11] : memref<16x64xf32, #tpu.memory_space<vmem>>, vector<16x64xf32>
      %c0_12 = arith.constant 0 : index
      %c0_13 = arith.constant 0 : index
      %15 = vector.load %arg5[%c0_12, %c0_13] : memref<1x64xf32, #tpu.memory_space<vmem>>, vector<1x64xf32>
      %16 = vector.broadcast %15 : vector<1x64xf32> to vector<16x64xf32>
      %17 = arith.addf %14, %16 : vector<16x64xf32>
      %cst_14 = arith.constant 5.000000e-01 : f32
      %18 = vector.broadcast %cst_14 : f32 to vector<16x64xf32>
      %19 = arith.mulf %18, %17 : vector<16x64xf32>
      %cst_15 = arith.constant 4.471500e-02 : f32
      %20 = vector.broadcast %cst_15 : f32 to vector<16x64xf32>
      %21 = arith.mulf %20, %17 : vector<16x64xf32>
      %22 = arith.mulf %21, %17 : vector<16x64xf32>
      %23 = arith.mulf %22, %17 : vector<16x64xf32>
      %24 = arith.addf %17, %23 : vector<16x64xf32>
      %cst_16 = arith.constant 0.797884583 : f32
      %25 = vector.broadcast %cst_16 : f32 to vector<16x64xf32>
      %26 = arith.mulf %25, %24 : vector<16x64xf32>
      %27 = math.tanh %26 : vector<16x64xf32>
      %cst_17 = arith.constant 1.000000e+00 : f32
      %28 = vector.broadcast %cst_17 : f32 to vector<16x64xf32>
      %29 = arith.addf %28, %27 : vector<16x64xf32>
      %30 = arith.mulf %19, %29 : vector<16x64xf32>
      %c0_18 = arith.constant 0 : index
      %c0_19 = arith.constant 0 : index
      %31 = vector.load %arg6[%c0_18, %c0_19] : memref<16x64xf32, #tpu.memory_space<vmem>>, vector<16x64xf32>
      tpu.vector_store %arg6[%c0_18, %c0_19], %30 {strides = array<i32>} : memref<16x64xf32, #tpu.memory_space<vmem>>, vector<16x64xf32>,
    } else {
    }
    return
  }
  func.func @transform_0(%arg0: i32, %arg1: i32, %arg2: i32) -> (i32, i32) {
    %c0_i32 = arith.constant 0 : i32
    return %arg0, %arg2 : i32, i32
  }
  func.func @transform_1(%arg0: i32, %arg1: i32, %arg2: i32) -> (i32, i32) {
    %c0_i32 = arith.constant 0 : i32
    return %arg2, %arg1 : i32, i32
  }
  func.func @transform_2(%arg0: i32, %arg1: i32, %arg2: i32) -> (i32, i32) {
    %c0_i32 = arith.constant 0 : i32
    %c0_i32_0 = arith.constant 0 : i32
    return %c0_i32, %arg1 : i32, i32
  }
  func.func @transform_3(%arg0: i32, %arg1: i32, %arg2: i32) -> (i32, i32) {
    %c0_i32 = arith.constant 0 : i32
    return %arg0, %arg1 : i32, i32
  }
}

module attributes {stable_mosaic.version = 11 : i64} {
  func.func @_matmul_residual_ln_kernel(%arg0: i32, %arg1: i32, %arg2: memref<16x64xf32, #tpu.memory_space<vmem>>, %arg3: memref<64x32xf32, #tpu.memory_space<vmem>>, %arg4: memref<1x32xf32, #tpu.memory_space<vmem>>, %arg5: memref<16x32xf32, #tpu.memory_space<vmem>>, %arg6: memref<1x32xf32, #tpu.memory_space<vmem>>, %arg7: memref<1x32xf32, #tpu.memory_space<vmem>>, %arg8: memref<16x32xf32, #tpu.memory_space<vmem>>, %arg9: memref<16x32xf32, #tpu.memory_space<vmem>>) attributes {dimension_semantics = [#tpu.dimension_semantics<parallel>, #tpu.dimension_semantics<arbitrary>], iteration_bounds = array<i64: 1, 1>, scalar_prefetch = 0 : i64, scratch_operands = 1 : i64, tpu.core_type = #tpu.core_type<tc>, window_params = [{transform_indices = @transform_0, window_bounds = array<i64: 16, 64>}, {transform_indices = @transform_1, window_bounds = array<i64: 64, 32>}, {pipeline_mode = #tpu.pipeline_mode<synchronous>, transform_indices = @transform_2, window_bounds = array<i64: 1, 32>}, {transform_indices = @transform_3, window_bounds = array<i64: 16, 32>}, {pipeline_mode = #tpu.pipeline_mode<synchronous>, transform_indices = @transform_4, window_bounds = array<i64: 1, 32>}, {pipeline_mode = #tpu.pipeline_mode<synchronous>, transform_indices = @transform_5, window_bounds = array<i64: 1, 32>}, {transform_indices = @transform_6, window_bounds = array<i64: 16, 32>}]} {
    %c0_i32 = arith.constant 0 : i32
    %0 = arith.cmpi eq, %arg1, %c0_i32 : i32
    %1 = arith.extui %0 : i1 to i32
    %c0_i32_0 = arith.constant 0 : i32
    %2 = arith.cmpi ne, %1, %c0_i32_0 : i32
    scf.if %2 {
      %cst_10 = arith.constant 0.000000e+00 : f32
      %14 = vector.broadcast %cst_10 : f32 to vector<16x32xf32>
      %c0_11 = arith.constant 0 : index
      %c0_12 = arith.constant 0 : index
      %15 = vector.load %arg9[%c0_11, %c0_12] : memref<16x32xf32, #tpu.memory_space<vmem>>, vector<16x32xf32>
      tpu.vector_store %arg9[%c0_11, %c0_12], %14 {strides = array<i32>} : memref<16x32xf32, #tpu.memory_space<vmem>>, vector<16x32xf32>,
    } else {
    }
    %c0 = arith.constant 0 : index
    %c0_1 = arith.constant 0 : index
    %3 = vector.load %arg9[%c0, %c0_1] : memref<16x32xf32, #tpu.memory_space<vmem>>, vector<16x32xf32>
    %c0_2 = arith.constant 0 : index
    %c0_3 = arith.constant 0 : index
    %4 = vector.load %arg2[%c0_2, %c0_3] : memref<16x64xf32, #tpu.memory_space<vmem>>, vector<16x64xf32>
    %5 = arith.truncf %4 : vector<16x64xf32> to vector<16x64xbf16>
    %c0_4 = arith.constant 0 : index
    %c0_5 = arith.constant 0 : index
    %6 = vector.load %arg3[%c0_4, %c0_5] : memref<64x32xf32, #tpu.memory_space<vmem>>, vector<64x32xf32>
    %7 = arith.truncf %6 : vector<64x32xf32> to vector<64x32xbf16>
    %cst = arith.constant dense<0.000000e+00> : vector<16x32xf32>
    %8 = tpu.matmul %5, %7, %cst {dimension_numbers = #tpu.dot_dimension_numbers<[1], [0], [0], [1], [0, 0, 1, 1], [], []>} : vector<16x64xbf16>, vector<64x32xbf16>, vector<16x32xf32> -> vector<16x32xf32>
    %9 = arith.addf %3, %8 : vector<16x32xf32>
    %c0_6 = arith.constant 0 : index
    %c0_7 = arith.constant 0 : index
    %10 = vector.load %arg9[%c0_6, %c0_7] : memref<16x32xf32, #tpu.memory_space<vmem>>, vector<16x32xf32>
    tpu.vector_store %arg9[%c0_6, %c0_7], %9 {strides = array<i32>} : memref<16x32xf32, #tpu.memory_space<vmem>>, vector<16x32xf32>,
    %c0_i32_8 = arith.constant 0 : i32
    %11 = arith.cmpi eq, %arg1, %c0_i32_8 : i32
    %12 = arith.extui %11 : i1 to i32
    %c0_i32_9 = arith.constant 0 : i32
    %13 = arith.cmpi ne, %12, %c0_i32_9 : i32
    scf.if %13 {
      %c0_10 = arith.constant 0 : index
      %c0_11 = arith.constant 0 : index
      %14 = vector.load %arg9[%c0_10, %c0_11] : memref<16x32xf32, #tpu.memory_space<vmem>>, vector<16x32xf32>
      %c0_12 = arith.constant 0 : index
      %c0_13 = arith.constant 0 : index
      %15 = vector.load %arg4[%c0_12, %c0_13] : memref<1x32xf32, #tpu.memory_space<vmem>>, vector<1x32xf32>
      %16 = vector.broadcast %15 : vector<1x32xf32> to vector<16x32xf32>
      %17 = arith.addf %14, %16 : vector<16x32xf32>
      %c0_14 = arith.constant 0 : index
      %c0_15 = arith.constant 0 : index
      %18 = vector.load %arg5[%c0_14, %c0_15] : memref<16x32xf32, #tpu.memory_space<vmem>>, vector<16x32xf32>
      %19 = arith.addf %17, %18 : vector<16x32xf32>
      %cst_16 = arith.constant dense<0.000000e+00> : vector<16xf32>
      %20 = vector.multi_reduction <add>, %19, %cst_16 [1] : vector<16x32xf32> to vector<16xf32>
      %21 = vector.shape_cast %20 : vector<16xf32> to vector<16x1xf32>
      %cst_17 = arith.constant 3.200000e+01 : f32
      %22 = vector.broadcast %cst_17 : f32 to vector<16x1xf32>
      %23 = arith.divf %21, %22 : vector<16x1xf32>
      %24 = vector.broadcast %23 : vector<16x1xf32> to vector<16x32xf32>
      %25 = arith.subf %19, %24 : vector<16x32xf32>
      %26 = arith.mulf %25, %25 : vector<16x32xf32>
      %cst_18 = arith.constant dense<0.000000e+00> : vector<16xf32>
      %27 = vector.multi_reduction <add>, %26, %cst_18 [1] : vector<16x32xf32> to vector<16xf32>
      %28 = vector.shape_cast %27 : vector<16xf32> to vector<16x1xf32>
      %cst_19 = arith.constant 3.200000e+01 : f32
      %29 = vector.broadcast %cst_19 : f32 to vector<16x1xf32>
      %30 = arith.divf %28, %29 : vector<16x1xf32>
      %cst_20 = arith.constant 9.99999997E-7 : f32
      %31 = vector.broadcast %cst_20 : f32 to vector<16x1xf32>
      %32 = arith.addf %30, %31 : vector<16x1xf32>
      %33 = math.rsqrt %32 : vector<16x1xf32>
      %34 = vector.broadcast %23 : vector<16x1xf32> to vector<16x32xf32>
      %35 = arith.subf %19, %34 : vector<16x32xf32>
      %36 = vector.broadcast %33 : vector<16x1xf32> to vector<16x32xf32>
      %37 = arith.mulf %35, %36 : vector<16x32xf32>
      %c0_21 = arith.constant 0 : index
      %c0_22 = arith.constant 0 : index
      %38 = vector.load %arg6[%c0_21, %c0_22] : memref<1x32xf32, #tpu.memory_space<vmem>>, vector<1x32xf32>
      %39 = vector.broadcast %38 : vector<1x32xf32> to vector<16x32xf32>
      %40 = arith.mulf %37, %39 : vector<16x32xf32>
      %c0_23 = arith.constant 0 : index
      %c0_24 = arith.constant 0 : index
      %41 = vector.load %arg7[%c0_23, %c0_24] : memref<1x32xf32, #tpu.memory_space<vmem>>, vector<1x32xf32>
      %42 = vector.broadcast %41 : vector<1x32xf32> to vector<16x32xf32>
      %43 = arith.addf %40, %42 : vector<16x32xf32>
      %c0_25 = arith.constant 0 : index
      %c0_26 = arith.constant 0 : index
      %44 = vector.load %arg8[%c0_25, %c0_26] : memref<16x32xf32, #tpu.memory_space<vmem>>, vector<16x32xf32>
      tpu.vector_store %arg8[%c0_25, %c0_26], %43 {strides = array<i32>} : memref<16x32xf32, #tpu.memory_space<vmem>>, vector<16x32xf32>,
    } else {
    }
    return
  }
  func.func @transform_0(%arg0: i32, %arg1: i32) -> (i32, i32) {
    %c0_i32 = arith.constant 0 : i32
    return %arg0, %arg1 : i32, i32
  }
  func.func @transform_1(%arg0: i32, %arg1: i32) -> (i32, i32) {
    %c0_i32 = arith.constant 0 : i32
    %c0_i32_0 = arith.constant 0 : i32
    return %arg1, %c0_i32 : i32, i32
  }
  func.func @transform_2(%arg0: i32, %arg1: i32) -> (i32, i32) {
    %c0_i32 = arith.constant 0 : i32
    %c0_i32_0 = arith.constant 0 : i32
    %c0_i32_1 = arith.constant 0 : i32
    return %c0_i32, %c0_i32_0 : i32, i32
  }
  func.func @transform_3(%arg0: i32, %arg1: i32) -> (i32, i32) {
    %c0_i32 = arith.constant 0 : i32
    %c0_i32_0 = arith.constant 0 : i32
    return %arg0, %c0_i32 : i32, i32
  }
  func.func @transform_4(%arg0: i32, %arg1: i32) -> (i32, i32) {
    %c0_i32 = arith.constant 0 : i32
    %c0_i32_0 = arith.constant 0 : i32
    %c0_i32_1 = arith.constant 0 : i32
    return %c0_i32, %c0_i32_0 : i32, i32
  }
  func.func @transform_5(%arg0: i32, %arg1: i32) -> (i32, i32) {
    %c0_i32 = arith.constant 0 : i32
    %c0_i32_0 = arith.constant 0 : i32
    %c0_i32_1 = arith.constant 0 : i32
    return %c0_i32, %c0_i32_0 : i32, i32
  }
  func.func @transform_6(%arg0: i32, %arg1: i32) -> (i32, i32) {
    %c0_i32 = arith.constant 0 : i32
    %c0_i32_0 = arith.constant 0 : i32
    return %arg0, %c0_i32 : i32, i32
  }
}

module attributes {stable_mosaic.version = 11 : i64} {
  func.func @_matmul_residual_ln_kernel(%arg0: i32, %arg1: i32, %arg2: memref<16x64xf32, #tpu.memory_space<vmem>>, %arg3: memref<64x32xf32, #tpu.memory_space<vmem>>, %arg4: memref<1x32xf32, #tpu.memory_space<vmem>>, %arg5: memref<16x32xf32, #tpu.memory_space<vmem>>, %arg6: memref<1x32xf32, #tpu.memory_space<vmem>>, %arg7: memref<1x32xf32, #tpu.memory_space<vmem>>, %arg8: memref<16x32xf32, #tpu.memory_space<vmem>>, %arg9: memref<16x32xf32, #tpu.memory_space<vmem>>) attributes {dimension_semantics = [#tpu.dimension_semantics<parallel>, #tpu.dimension_semantics<arbitrary>], iteration_bounds = array<i64: 1, 1>, scalar_prefetch = 0 : i64, scratch_operands = 1 : i64, tpu.core_type = #tpu.core_type<tc>, window_params = [{transform_indices = @transform_0, window_bounds = array<i64: 16, 64>}, {transform_indices = @transform_1, window_bounds = array<i64: 64, 32>}, {pipeline_mode = #tpu.pipeline_mode<synchronous>, transform_indices = @transform_2, window_bounds = array<i64: 1, 32>}, {transform_indices = @transform_3, window_bounds = array<i64: 16, 32>}, {pipeline_mode = #tpu.pipeline_mode<synchronous>, transform_indices = @transform_4, window_bounds = array<i64: 1, 32>}, {pipeline_mode = #tpu.pipeline_mode<synchronous>, transform_indices = @transform_5, window_bounds = array<i64: 1, 32>}, {transform_indices = @transform_6, window_bounds = array<i64: 16, 32>}]} {
    %c0_i32 = arith.constant 0 : i32
    %0 = arith.cmpi eq, %arg1, %c0_i32 : i32
    %1 = arith.extui %0 : i1 to i32
    %c0_i32_0 = arith.constant 0 : i32
    %2 = arith.cmpi ne, %1, %c0_i32_0 : i32
    scf.if %2 {
      %cst_10 = arith.constant 0.000000e+00 : f32
      %14 = vector.broadcast %cst_10 : f32 to vector<16x32xf32>
      %c0_11 = arith.constant 0 : index
      %c0_12 = arith.constant 0 : index
      %15 = vector.load %arg9[%c0_11, %c0_12] : memref<16x32xf32, #tpu.memory_space<vmem>>, vector<16x32xf32>
      tpu.vector_store %arg9[%c0_11, %c0_12], %14 {strides = array<i32>} : memref<16x32xf32, #tpu.memory_space<vmem>>, vector<16x32xf32>,
    } else {
    }
    %c0 = arith.constant 0 : index
    %c0_1 = arith.constant 0 : index
    %3 = vector.load %arg9[%c0, %c0_1] : memref<16x32xf32, #tpu.memory_space<vmem>>, vector<16x32xf32>
    %c0_2 = arith.constant 0 : index
    %c0_3 = arith.constant 0 : index
    %4 = vector.load %arg2[%c0_2, %c0_3] : memref<16x64xf32, #tpu.memory_space<vmem>>, vector<16x64xf32>
    %5 = arith.truncf %4 : vector<16x64xf32> to vector<16x64xbf16>
    %c0_4 = arith.constant 0 : index
    %c0_5 = arith.constant 0 : index
    %6 = vector.load %arg3[%c0_4, %c0_5] : memref<64x32xf32, #tpu.memory_space<vmem>>, vector<64x32xf32>
    %7 = arith.truncf %6 : vector<64x32xf32> to vector<64x32xbf16>
    %cst = arith.constant dense<0.000000e+00> : vector<16x32xf32>
    %8 = tpu.matmul %5, %7, %cst {dimension_numbers = #tpu.dot_dimension_numbers<[1], [0], [0], [1], [0, 0, 1, 1], [], []>} : vector<16x64xbf16>, vector<64x32xbf16>, vector<16x32xf32> -> vector<16x32xf32>
    %9 = arith.addf %3, %8 : vector<16x32xf32>
    %c0_6 = arith.constant 0 : index
    %c0_7 = arith.constant 0 : index
    %10 = vector.load %arg9[%c0_6, %c0_7] : memref<16x32xf32, #tpu.memory_space<vmem>>, vector<16x32xf32>
    tpu.vector_store %arg9[%c0_6, %c0_7], %9 {strides = array<i32>} : memref<16x32xf32, #tpu.memory_space<vmem>>, vector<16x32xf32>,
    %c0_i32_8 = arith.constant 0 : i32
    %11 = arith.cmpi eq, %arg1, %c0_i32_8 : i32
    %12 = arith.extui %11 : i1 to i32
    %c0_i32_9 = arith.constant 0 : i32
    %13 = arith.cmpi ne, %12, %c0_i32_9 : i32
    scf.if %13 {
      %c0_10 = arith.constant 0 : index
      %c0_11 = arith.constant 0 : index
      %14 = vector.load %arg9[%c0_10, %c0_11] : memref<16x32xf32, #tpu.memory_space<vmem>>, vector<16x32xf32>
      %c0_12 = arith.constant 0 : index
      %c0_13 = arith.constant 0 : index
      %15 = vector.load %arg4[%c0_12, %c0_13] : memref<1x32xf32, #tpu.memory_space<vmem>>, vector<1x32xf32>
      %16 = vector.broadcast %15 : vector<1x32xf32> to vector<16x32xf32>
      %17 = arith.addf %14, %16 : vector<16x32xf32>
      %c0_14 = arith.constant 0 : index
      %c0_15 = arith.constant 0 : index
      %18 = vector.load %arg5[%c0_14, %c0_15] : memref<16x32xf32, #tpu.memory_space<vmem>>, vector<16x32xf32>
      %19 = arith.addf %17, %18 : vector<16x32xf32>
      %cst_16 = arith.constant dense<0.000000e+00> : vector<16xf32>
      %20 = vector.multi_reduction <add>, %19, %cst_16 [1] : vector<16x32xf32> to vector<16xf32>
      %21 = vector.shape_cast %20 : vector<16xf32> to vector<16x1xf32>
      %cst_17 = arith.constant 3.200000e+01 : f32
      %22 = vector.broadcast %cst_17 : f32 to vector<16x1xf32>
      %23 = arith.divf %21, %22 : vector<16x1xf32>
      %24 = vector.broadcast %23 : vector<16x1xf32> to vector<16x32xf32>
      %25 = arith.subf %19, %24 : vector<16x32xf32>
      %26 = arith.mulf %25, %25 : vector<16x32xf32>
      %cst_18 = arith.constant dense<0.000000e+00> : vector<16xf32>
      %27 = vector.multi_reduction <add>, %26, %cst_18 [1] : vector<16x32xf32> to vector<16xf32>
      %28 = vector.shape_cast %27 : vector<16xf32> to vector<16x1xf32>
      %cst_19 = arith.constant 3.200000e+01 : f32
      %29 = vector.broadcast %cst_19 : f32 to vector<16x1xf32>
      %30 = arith.divf %28, %29 : vector<16x1xf32>
      %cst_20 = arith.constant 9.99999997E-7 : f32
      %31 = vector.broadcast %cst_20 : f32 to vector<16x1xf32>
      %32 = arith.addf %30, %31 : vector<16x1xf32>
      %33 = math.rsqrt %32 : vector<16x1xf32>
      %34 = vector.broadcast %23 : vector<16x1xf32> to vector<16x32xf32>
      %35 = arith.subf %19, %34 : vector<16x32xf32>
      %36 = vector.broadcast %33 : vector<16x1xf32> to vector<16x32xf32>
      %37 = arith.mulf %35, %36 : vector<16x32xf32>
      %c0_21 = arith.constant 0 : index
      %c0_22 = arith.constant 0 : index
      %38 = vector.load %arg6[%c0_21, %c0_22] : memref<1x32xf32, #tpu.memory_space<vmem>>, vector<1x32xf32>
      %39 = vector.broadcast %38 : vector<1x32xf32> to vector<16x32xf32>
      %40 = arith.mulf %37, %39 : vector<16x32xf32>
      %c0_23 = arith.constant 0 : index
      %c0_24 = arith.constant 0 : index
      %41 = vector.load %arg7[%c0_23, %c0_24] : memref<1x32xf32, #tpu.memory_space<vmem>>, vector<1x32xf32>
      %42 = vector.broadcast %41 : vector<1x32xf32> to vector<16x32xf32>
      %43 = arith.addf %40, %42 : vector<16x32xf32>
      %c0_25 = arith.constant 0 : index
      %c0_26 = arith.constant 0 : index
      %44 = vector.load %arg8[%c0_25, %c0_26] : memref<16x32xf32, #tpu.memory_space<vmem>>, vector<16x32xf32>
      tpu.vector_store %arg8[%c0_25, %c0_26], %43 {strides = array<i32>} : memref<16x32xf32, #tpu.memory_space<vmem>>, vector<16x32xf32>,
    } else {
    }
    return
  }
  func.func @transform_0(%arg0: i32, %arg1: i32) -> (i32, i32) {
    %c0_i32 = arith.constant 0 : i32
    return %arg0, %arg1 : i32, i32
  }
  func.func @transform_1(%arg0: i32, %arg1: i32) -> (i32, i32) {
    %c0_i32 = arith.constant 0 : i32
    %c0_i32_0 = arith.constant 0 : i32
    return %arg1, %c0_i32 : i32, i32
  }
  func.func @transform_2(%arg0: i32, %arg1: i32) -> (i32, i32) {
    %c0_i32 = arith.constant 0 : i32
    %c0_i32_0 = arith.constant 0 : i32
    %c0_i32_1 = arith.constant 0 : i32
    return %c0_i32, %c0_i32_0 : i32, i32
  }
  func.func @transform_3(%arg0: i32, %arg1: i32) -> (i32, i32) {
    %c0_i32 = arith.constant 0 : i32
    %c0_i32_0 = arith.constant 0 : i32
    return %arg0, %c0_i32 : i32, i32
  }
  func.func @transform_4(%arg0: i32, %arg1: i32) -> (i32, i32) {
    %c0_i32 = arith.constant 0 : i32
    %c0_i32_0 = arith.constant 0 : i32
    %c0_i32_1 = arith.constant 0 : i32
    return %c0_i32, %c0_i32_0 : i32, i32
  }
  func.func @transform_5(%arg0: i32, %arg1: i32) -> (i32, i32) {
    %c0_i32 = arith.constant 0 : i32
    %c0_i32_0 = arith.constant 0 : i32
    %c0_i32_1 = arith.constant 0 : i32
    return %c0_i32, %c0_i32_0 : i32, i32
  }
  func.func @transform_6(%arg0: i32, %arg1: i32) -> (i32, i32) {
    %c0_i32 = arith.constant 0 : i32
    %c0_i32_0 = arith.constant 0 : i32
    return %arg0, %c0_i32 : i32, i32
  }
}

</mosaic_0001>

<llo_original>
// kernel: bert_forward.10
$region0: #{bert_forward.10}
  #allocation0 [shape = 'u32[]', space=smem, size = 0x4, offset = 0x4, fixed_abs, tag = 'smem constant byte address 0x4 - core index']
  #allocation1 [shape = 'u32[144,128]{1,0:T(1,128)}', space=vmem, size = 0x12000, scoped, tag = 'internal scratch']
  #allocation2 [shape = 'f32[16,96]{1,0:T(8,128)}', space=vmem, size = 0x2000, scoped, tag = 'scratch operand']
  %s0 = inlined_call_operand.vmem [shape: f32[16,32], index: 0, kind: input, shape index: {}]
  %s1 = inlined_call_operand.vmem [shape: f32[32,96], index: 1, kind: input, shape index: {}]
  %s2 = inlined_call_operand.vmem [shape: f32[1,96], index: 2, kind: input, shape index: {}]
  %s3 = inlined_call_operand.vmem [shape: f32[16,96], index: 3, kind: output, shape index: {}]
  %s4 = sld [smem:[#allocation0]]
  $region30: #{bert_forward.10} parent=0
    _
  %s6 = ssub.s32 1, %s4
  %s7 = scalar_select 0, %s6, %s4
  // Predicated region
  $region2: #{bert_forward.10} parent=0 // pred_check
    _
  $region3: #{bert_forward.10} parent=0 // pred_check_branch
    %9 = sbr.rel (0) target = $region5
  $region4: #{bert_forward.10} parent=0 // pred_region
    _
  $region5: #{bert_forward.10} parent=0 // pred_fallthru
    _
  // Predicated region
  $region6: #{bert_forward.10} parent=0 // pred_check
    _
  $region7: #{bert_forward.10} parent=0 // pred_check_branch
    %11 = sbr.rel (0) target = $region9
  $region8: #{bert_forward.10} parent=0 // pred_region
    _
  $region9: #{bert_forward.10} parent=0 // pred_fallthru
    _
  // Predicated region
  $region10: #{bert_forward.10} parent=0 // pred_check
    _
  $region11: #{bert_forward.10} parent=0 // pred_check_branch
    %13 = sbr.rel (0) target = $region13
  $region12: #{bert_forward.10} parent=0 // pred_region
    _
  $region13: #{bert_forward.10} parent=0 // pred_fallthru
    _
  %p15 = scmp.eq.s32.totalorder 0, 0
  // Predicated region
  $region14: #{bert_forward.10} parent=0 // pred_check
    %p16 = pneg %p15
  $region15: #{bert_forward.10} parent=0 // pred_check_branch
    %18 = sbr.rel (%p16) target = $region17
  $region16: #{bert_forward.10} parent=0 // pred_region
    %vm19 = vcmask 785408
    %20 = vst.msk [vmem:[#allocation2] sm:$0xff] %vm19, 0.0
    %21 = vst.msk [vmem:[#allocation2 + $0x8] sm:$0xff] %vm19, 0.0
  $region17: #{bert_forward.10} parent=0 // pred_fallthru
    _
  %v22 = vld [vmem:[#allocation2] sm:$0xff]
  %v23 = vld [vmem:[#allocation2 + $0x8] sm:$0xff]
  %v24 = vld [vmem:[%s0] sm:$0xff]
  %v25 = vld [vmem:[%s0 + $0x8] sm:$0xff]
  %v26 = vpack.c.bf16 %v25, %v24
  %v27 = vld [vmem:[%s1] sm:$0xff]
  %v28 = vld [vmem:[%s1 + $0x8] sm:$0xff]
  %v29 = vld [vmem:[%s1 + $0x10] sm:$0xff]
  %v30 = vld [vmem:[%s1 + $0x18] sm:$0xff]
  %v31 = vpack.c.bf16 %v28, %v27
  %v32 = vpack.c.bf16 %v30, %v29
  %vm33 = vcmask 261120
  %v35 = vsel %vm33, %v26, 0
  %37 = vmatprep.subr.bf16.mxu0 0
  %38 = vmatpush1.bf16.msra.mxu0 0
  %39 = vmatprep.subr.bf16.mxu0 0
  %40 = vmatpush1.bf16.msra.mxu0 0
  %41 = vmatprep.subr.bf16.mxu0 0
  %42 = vmatpush1.bf16.msra.mxu0 0
  %43 = vmatprep.subr.bf16.mxu0 0
  %44 = vmatpush1.bf16.msra.mxu0 0
  %45 = vmatprep.subr.bf16.mxu0 0
  %46 = vmatpush1.bf16.msra.mxu0 0
  %47 = vmatprep.subr.bf16.mxu0 0
  %48 = vmatpush1.bf16.msra.mxu0 0
  %49 = vmatprep.subr.bf16.mxu0 0
  %50 = vmatpush1.bf16.msra.mxu0 %v32
  %51 = vmatprep.subr.bf16.mxu0 0
  %52 = vmatpush1.bf16.msra.mxu0 %v31
  %53 = vmatprep.subr.bf16.mxu0 0
  %54 = vmatpush2.bf16.msra.mxu0 0
  %55 = vmatprep.subr.bf16.mxu0 0
  %56 = vmatpush2.bf16.msra.mxu0 0
  %57 = vmatprep.subr.bf16.mxu0 0
  %58 = vmatpush2.bf16.msra.mxu0 0
  %59 = vmatprep.subr.bf16.mxu0 0
  %60 = vmatpush2.bf16.msra.mxu0 0
  %61 = vmatprep.subr.bf16.mxu0 0
  %62 = vmatpush2.bf16.msra.mxu0 0
  %63 = vmatprep.subr.bf16.mxu0 0
  %64 = vmatpush2.bf16.msra.mxu0 0
  %65 = vmatprep.subr.bf16.mxu0 0
  %66 = vmatpush2.bf16.msra.mxu0 0
  %67 = vmatprep.subr.bf16.mxu0 0
  %68 = vmatpush2.bf16.msra.mxu0 0
  %69 = vmatprep.mubr.bf16.mxu0 0
  %70 = vmatmul.mubr.bf16.gmra.mxu0 %v35
  %v71 = vpop.f32.mrf.mxu0
  %v72 = vadd.f32 0.0, %v71
  %v73 = vpop.f32.mrf.mxu0
  %v74 = vpop.f32.mrf.mxu0
  %v75 = vadd.f32 0.0, %v74
  %v76 = vpop.f32.mrf.mxu0
  %77 = vdwg.mxu0
  %v78 = vadd.f32 %v22, %v72
  %v79 = vadd.f32 %v23, %v75
  %vm80 = vcmask 785408
  %81 = vst.msk [vmem:[#allocation2] sm:$0xff] %vm80, %v78
  %82 = vst.msk [vmem:[#allocation2 + $0x8] sm:$0xff] %vm80, %v79
  // Predicated region
  $region18: #{bert_forward.10} parent=0 // pred_check
    %p83 = pneg %p15
  $region19: #{bert_forward.10} parent=0 // pred_check_branch
    %85 = sbr.rel (%p83) target = $region21
  $region20: #{bert_forward.10} parent=0 // pred_region
    %v86 = vld [vmem:[#allocation2] sm:$0xff]
    %v87 = vld [vmem:[#allocation2 + $0x8] sm:$0xff]
    %v88 = vld [vmem:[%s2] sm:$0x1]
    %v90 = vlaneseq
    %v91 = vshrl.u32 %v90, 7
    %v92 = vsub.s32 0, %v91
    %v93 = vrot.slane %v88, %v92
    %v95 = vadd.f32 %v86, %v93
    %v96 = vadd.f32 %v87, %v93
    %97 = vst.msk [vmem:[%s3] sm:$0xff] %vm80, %v95
    %98 = vst.msk [vmem:[%s3 + $0x8] sm:$0xff] %vm80, %v96
  $region21: #{bert_forward.10} parent=0 // pred_fallthru
    _
  // Predicated region
  $region22: #{bert_forward.10} parent=0 // pred_check
    _
  $region23: #{bert_forward.10} parent=0 // pred_check_branch
    %100 = sbr.rel (0) target = $region25
  $region24: #{bert_forward.10} parent=0 // pred_region
    _
  $region25: #{bert_forward.10} parent=0 // pred_fallthru
    _
  // Predicated region
  $region26: #{bert_forward.10} parent=0 // pred_check
    _
  $region27: #{bert_forward.10} parent=0 // pred_check_branch
    %102 = sbr.rel (0) target = $region29
  $region28: #{bert_forward.10} parent=0 // pred_region
    _
  $region29: #{bert_forward.10} parent=0 // pred_fallthru
    _

// kernel: bert_forward.13
$region0: #{bert_forward.13}
  #allocation0 [shape = 'u32[]', space=smem, size = 0x4, offset = 0x4, fixed_abs, tag = 'smem constant byte address 0x4 - core index']
  #allocation1 [shape = 'u32[144,128]{1,0:T(1,128)}', space=vmem, size = 0x12000, scoped, tag = 'internal scratch']
  #allocation2 [shape = 'f32[16,64]{1,0:T(8,128)}', space=vmem, size = 0x2000, scoped, tag = 'scratch operand']
  %s0 = inlined_call_operand.vmem [shape: f32[16,32], index: 0, kind: input, shape index: {}]
  %s1 = inlined_call_operand.vmem [shape: f32[32,64], index: 1, kind: input, shape index: {}]
  %s2 = inlined_call_operand.vmem [shape: f32[1,64], index: 2, kind: input, shape index: {}]
  %s3 = inlined_call_operand.vmem [shape: f32[16,64], index: 3, kind: output, shape index: {}]
  %s4 = sld [smem:[#allocation0]]
  $region30: #{bert_forward.13} parent=0
    _
  %s6 = ssub.s32 1, %s4
  %s7 = scalar_select 0, %s6, %s4
  // Predicated region
  $region2: #{bert_forward.13} parent=0 // pred_check
    _
  $region3: #{bert_forward.13} parent=0 // pred_check_branch
    %9 = sbr.rel (0) target = $region5
  $region4: #{bert_forward.13} parent=0 // pred_region
    _
  $region5: #{bert_forward.13} parent=0 // pred_fallthru
    _
  // Predicated region
  $region6: #{bert_forward.13} parent=0 // pred_check
    _
  $region7: #{bert_forward.13} parent=0 // pred_check_branch
    %11 = sbr.rel (0) target = $region9
  $region8: #{bert_forward.13} parent=0 // pred_region
    _
  $region9: #{bert_forward.13} parent=0 // pred_fallthru
    _
  // Predicated region
  $region10: #{bert_forward.13} parent=0 // pred_check
    _
  $region11: #{bert_forward.13} parent=0 // pred_check_branch
    %13 = sbr.rel (0) target = $region13
  $region12: #{bert_forward.13} parent=0 // pred_region
    _
  $region13: #{bert_forward.13} parent=0 // pred_fallthru
    _
  %p15 = scmp.eq.s32.totalorder 0, 0
  // Predicated region
  $region14: #{bert_forward.13} parent=0 // pred_check
    %p16 = pneg %p15
  $region15: #{bert_forward.13} parent=0 // pred_check_branch
    %18 = sbr.rel (%p16) target = $region17
  $region16: #{bert_forward.13} parent=0 // pred_region
    %vm19 = vcmask 523264
    %20 = vst.msk [vmem:[#allocation2] sm:$0xff] %vm19, 0.0
    %21 = vst.msk [vmem:[#allocation2 + $0x8] sm:$0xff] %vm19, 0.0
  $region17: #{bert_forward.13} parent=0 // pred_fallthru
    _
  %v22 = vld [vmem:[#allocation2] sm:$0xff]
  %v23 = vld [vmem:[#allocation2 + $0x8] sm:$0xff]
  %v24 = vld [vmem:[%s0] sm:$0xff]
  %v25 = vld [vmem:[%s0 + $0x8] sm:$0xff]
  %v26 = vpack.c.bf16 %v25, %v24
  %v27 = vld [vmem:[%s1] sm:$0xff]
  %v28 = vld [vmem:[%s1 + $0x8] sm:$0xff]
  %v29 = vld [vmem:[%s1 + $0x10] sm:$0xff]
  %v30 = vld [vmem:[%s1 + $0x18] sm:$0xff]
  %v31 = vpack.c.bf16 %v28, %v27
  %v32 = vpack.c.bf16 %v30, %v29
  %vm33 = vcmask 261120
  %v35 = vsel %vm33, %v26, 0
  %37 = vmatprep.subr.bf16.mxu0 0
  %38 = vmatpush1.bf16.msra.mxu0 0
  %39 = vmatprep.subr.bf16.mxu0 0
  %40 = vmatpush1.bf16.msra.mxu0 0
  %41 = vmatprep.subr.bf16.mxu0 0
  %42 = vmatpush1.bf16.msra.mxu0 0
  %43 = vmatprep.subr.bf16.mxu0 0
  %44 = vmatpush1.bf16.msra.mxu0 0
  %45 = vmatprep.subr.bf16.mxu0 0
  %46 = vmatpush1.bf16.msra.mxu0 0
  %47 = vmatprep.subr.bf16.mxu0 0
  %48 = vmatpush1.bf16.msra.mxu0 0
  %49 = vmatprep.subr.bf16.mxu0 0
  %50 = vmatpush1.bf16.msra.mxu0 %v32
  %51 = vmatprep.subr.bf16.mxu0 0
  %52 = vmatpush1.bf16.msra.mxu0 %v31
  %53 = vmatprep.subr.bf16.mxu0 0
  %54 = vmatpush2.bf16.msra.mxu0 0
  %55 = vmatprep.subr.bf16.mxu0 0
  %56 = vmatpush2.bf16.msra.mxu0 0
  %57 = vmatprep.subr.bf16.mxu0 0
  %58 = vmatpush2.bf16.msra.mxu0 0
  %59 = vmatprep.subr.bf16.mxu0 0
  %60 = vmatpush2.bf16.msra.mxu0 0
  %61 = vmatprep.subr.bf16.mxu0 0
  %62 = vmatpush2.bf16.msra.mxu0 0
  %63 = vmatprep.subr.bf16.mxu0 0
  %64 = vmatpush2.bf16.msra.mxu0 0
  %65 = vmatprep.subr.bf16.mxu0 0
  %66 = vmatpush2.bf16.msra.mxu0 0
  %67 = vmatprep.subr.bf16.mxu0 0
  %68 = vmatpush2.bf16.msra.mxu0 0
  %69 = vmatprep.mubr.bf16.mxu0 0
  %70 = vmatmul.mubr.bf16.gmra.mxu0 %v35
  %v71 = vpop.f32.mrf.mxu0
  %v72 = vadd.f32 0.0, %v71
  %v73 = vpop.f32.mrf.mxu0
  %v74 = vpop.f32.mrf.mxu0
  %v75 = vadd.f32 0.0, %v74
  %v76 = vpop.f32.mrf.mxu0
  %77 = vdwg.mxu0
  %v78 = vadd.f32 %v22, %v72
  %v79 = vadd.f32 %v23, %v75
  %vm80 = vcmask 523264
  %81 = vst.msk [vmem:[#allocation2] sm:$0xff] %vm80, %v78
  %82 = vst.msk [vmem:[#allocation2 + $0x8] sm:$0xff] %vm80, %v79
  // Predicated region
  $region18: #{bert_forward.13} parent=0 // pred_check
    %p83 = pneg %p15
  $region19: #{bert_forward.13} parent=0 // pred_check_branch
    %85 = sbr.rel (%p83) target = $region21
  $region20: #{bert_forward.13} parent=0 // pred_region
    %v86 = vld [vmem:[#allocation2] sm:$0xff]
    %v87 = vld [vmem:[#allocation2 + $0x8] sm:$0xff]
    %v88 = vld [vmem:[%s2] sm:$0x1]
    %v90 = vlaneseq
    %v91 = vshrl.u32 %v90, 7
    %v92 = vsub.s32 0, %v91
    %v93 = vrot.slane %v88, %v92
    %v95 = vadd.f32 %v86, %v93
    %v96 = vadd.f32 %v87, %v93
    %v97 = vmul.f32 %v95, 0.5
    %v98 = vmul.f32 %v96, 0.5
    %v99 = vmul.f32 %v95, 0.044715
    %v100 = vmul.f32 %v96, 0.044715
    %v101 = vmul.f32 %v99, %v95
    %v102 = vmul.f32 %v100, %v96
    %v103 = vmul.f32 %v101, %v95
    %v104 = vmul.f32 %v102, %v96
    %v105 = vadd.f32 %v95, %v103
    %v106 = vadd.f32 %v96, %v104
    %v107 = vmul.f32 %v105, 0.7978846
    %v108 = vmul.f32 %v106, 0.7978846
    %v109 = vtanh.pop %v107
    %v110 = vtanh.pop %v108
    %v111 = vadd.f32 %v109, 1.0
    %v112 = vadd.f32 %v110, 1.0
    %v113 = vmul.f32 %v97, %v111
    %v114 = vmul.f32 %v98, %v112
    %115 = vst.msk [vmem:[%s3] sm:$0xff] %vm80, %v113
    %116 = vst.msk [vmem:[%s3 + $0x8] sm:$0xff] %vm80, %v114
  $region21: #{bert_forward.13} parent=0 // pred_fallthru
    _
  // Predicated region
  $region22: #{bert_forward.13} parent=0 // pred_check
    _
  $region23: #{bert_forward.13} parent=0 // pred_check_branch
    %118 = sbr.rel (0) target = $region25
  $region24: #{bert_forward.13} parent=0 // pred_region
    _
  $region25: #{bert_forward.13} parent=0 // pred_fallthru
    _
  // Predicated region
  $region26: #{bert_forward.13} parent=0 // pred_check
    _
  $region27: #{bert_forward.13} parent=0 // pred_check_branch
    %120 = sbr.rel (0) target = $region29
  $region28: #{bert_forward.13} parent=0 // pred_region
    _
  $region29: #{bert_forward.13} parent=0 // pred_fallthru
    _

// kernel: bert_forward.12
$region0: #{bert_forward.12}
  #allocation0 [shape = 'u32[]', space=smem, size = 0x4, offset = 0x4, fixed_abs, tag = 'smem constant byte address 0x4 - core index']
  #allocation1 [shape = 'u32[144,128]{1,0:T(1,128)}', space=vmem, size = 0x12000, scoped, tag = 'internal scratch']
  #allocation2 [shape = 'f32[16,32]{1,0:T(8,128)}', space=vmem, size = 0x2000, scoped, tag = 'scratch operand']
  %s0 = inlined_call_operand.vmem [shape: f32[16,32], index: 0, kind: input, shape index: {}]
  %s1 = inlined_call_operand.vmem [shape: f32[32,32], index: 1, kind: input, shape index: {}]
  %s2 = inlined_call_operand.vmem [shape: f32[1,32], index: 2, kind: input, shape index: {}]
  %s3 = inlined_call_operand.vmem [shape: f32[16,32], index: 3, kind: input, shape index: {}]
  %s4 = inlined_call_operand.vmem [shape: f32[1,32], index: 4, kind: input, shape index: {}]
  %s5 = inlined_call_operand.vmem [shape: f32[1,32], index: 5, kind: input, shape index: {}]
  %s6 = inlined_call_operand.vmem [shape: f32[16,32], index: 6, kind: output, shape index: {}]
  %s7 = sld [smem:[#allocation0]]
  $region42: #{bert_forward.12} parent=0
    _
  %s9 = ssub.s32 1, %s7
  %s10 = scalar_select 0, %s9, %s7
  // Predicated region
  $region2: #{bert_forward.12} parent=0 // pred_check
    _
  $region3: #{bert_forward.12} parent=0 // pred_check_branch
    %12 = sbr.rel (0) target = $region5
  $region4: #{bert_forward.12} parent=0 // pred_region
    _
  $region5: #{bert_forward.12} parent=0 // pred_fallthru
    _
  // Predicated region
  $region6: #{bert_forward.12} parent=0 // pred_check
    _
  $region7: #{bert_forward.12} parent=0 // pred_check_branch
    %14 = sbr.rel (0) target = $region9
  $region8: #{bert_forward.12} parent=0 // pred_region
    _
  $region9: #{bert_forward.12} parent=0 // pred_fallthru
    _
  // Predicated region
  $region10: #{bert_forward.12} parent=0 // pred_check
    _
  $region11: #{bert_forward.12} parent=0 // pred_check_branch
    %16 = sbr.rel (0) target = $region13
  $region12: #{bert_forward.12} parent=0 // pred_region
    _
  $region13: #{bert_forward.12} parent=0 // pred_fallthru
    _
  // Predicated region
  $region14: #{bert_forward.12} parent=0 // pred_check
    _
  $region15: #{bert_forward.12} parent=0 // pred_check_branch
    %18 = sbr.rel (0) target = $region17
  $region16: #{bert_forward.12} parent=0 // pred_region
    _
  $region17: #{bert_forward.12} parent=0 // pred_fallthru
    _
  // Predicated region
  $region18: #{bert_forward.12} parent=0 // pred_check
    _
  $region19: #{bert_forward.12} parent=0 // pred_check_branch
    %20 = sbr.rel (0) target = $region21
  $region20: #{bert_forward.12} parent=0 // pred_region
    _
  $region21: #{bert_forward.12} parent=0 // pred_fallthru
    _
  // Predicated region
  $region22: #{bert_forward.12} parent=0 // pred_check
    _
  $region23: #{bert_forward.12} parent=0 // pred_check_branch
    %22 = sbr.rel (0) target = $region25
  $region24: #{bert_forward.12} parent=0 // pred_region
    _
  $region25: #{bert_forward.12} parent=0 // pred_fallthru
    _
  %p24 = scmp.eq.s32.totalorder 0, 0
  // Predicated region
  $region26: #{bert_forward.12} parent=0 // pred_check
    %p25 = pneg %p24
  $region27: #{bert_forward.12} parent=0 // pred_check_branch
    %27 = sbr.rel (%p25) target = $region29
  $region28: #{bert_forward.12} parent=0 // pred_region
    %vm28 = vcmask 261120
    %29 = vst.msk [vmem:[#allocation2] sm:$0xff] %vm28, 0.0
    %30 = vst.msk [vmem:[#allocation2 + $0x8] sm:$0xff] %vm28, 0.0
  $region29: #{bert_forward.12} parent=0 // pred_fallthru
    _
  %v31 = vld [vmem:[#allocation2] sm:$0xff]
  %v32 = vld [vmem:[#allocation2 + $0x8] sm:$0xff]
  %v33 = vld [vmem:[%s0] sm:$0xff]
  %v34 = vld [vmem:[%s0 + $0x8] sm:$0xff]
  %v35 = vpack.c.bf16 %v34, %v33
  %v36 = vld [vmem:[%s1] sm:$0xff]
  %v37 = vld [vmem:[%s1 + $0x8] sm:$0xff]
  %v38 = vld [vmem:[%s1 + $0x10] sm:$0xff]
  %v39 = vld [vmem:[%s1 + $0x18] sm:$0xff]
  %v40 = vpack.c.bf16 %v37, %v36
  %v41 = vpack.c.bf16 %v39, %v38
  %vm42 = vcmask 261120
  %v44 = vsel %vm42, %v35, 0
  %46 = vmatprep.subr.bf16.mxu0 0
  %47 = vmatpush1.bf16.msra.mxu0 0
  %48 = vmatprep.subr.bf16.mxu0 0
  %49 = vmatpush1.bf16.msra.mxu0 0
  %50 = vmatprep.subr.bf16.mxu0 0
  %51 = vmatpush1.bf16.msra.mxu0 0
  %52 = vmatprep.subr.bf16.mxu0 0
  %53 = vmatpush1.bf16.msra.mxu0 0
  %54 = vmatprep.subr.bf16.mxu0 0
  %55 = vmatpush1.bf16.msra.mxu0 0
  %56 = vmatprep.subr.bf16.mxu0 0
  %57 = vmatpush1.bf16.msra.mxu0 0
  %58 = vmatprep.subr.bf16.mxu0 0
  %59 = vmatpush1.bf16.msra.mxu0 %v41
  %60 = vmatprep.subr.bf16.mxu0 0
  %61 = vmatpush1.bf16.msra.mxu0 %v40
  %62 = vmatprep.subr.bf16.mxu0 0
  %63 = vmatpush2.bf16.msra.mxu0 0
  %64 = vmatprep.subr.bf16.mxu0 0
  %65 = vmatpush2.bf16.msra.mxu0 0
  %66 = vmatprep.subr.bf16.mxu0 0
  %67 = vmatpush2.bf16.msra.mxu0 0
  %68 = vmatprep.subr.bf16.mxu0 0
  %69 = vmatpush2.bf16.msra.mxu0 0
  %70 = vmatprep.subr.bf16.mxu0 0
  %71 = vmatpush2.bf16.msra.mxu0 0
  %72 = vmatprep.subr.bf16.mxu0 0
  %73 = vmatpush2.bf16.msra.mxu0 0
  %74 = vmatprep.subr.bf16.mxu0 0
  %75 = vmatpush2.bf16.msra.mxu0 0
  %76 = vmatprep.subr.bf16.mxu0 0
  %77 = vmatpush2.bf16.msra.mxu0 0
  %78 = vmatprep.mubr.bf16.mxu0 0
  %79 = vmatmul.mubr.bf16.gmra.mxu0 %v44
  %v80 = vpop.f32.mrf.mxu0
  %v81 = vadd.f32 0.0, %v80
  %v82 = vpop.f32.mrf.mxu0
  %v83 = vpop.f32.mrf.mxu0
  %v84 = vadd.f32 0.0, %v83
  %v85 = vpop.f32.mrf.mxu0
  %86 = vdwg.mxu0
  %v87 = vadd.f32 %v31, %v81
  %v88 = vadd.f32 %v32, %v84
  %89 = vst.msk [vmem:[#allocation2] sm:$0xff] %vm42, %v87
  %90 = vst.msk [vmem:[#allocation2 + $0x8] sm:$0xff] %vm42, %v88
  // Predicated region
  $region30: #{bert_forward.12} parent=0 // pred_check
    %p91 = pneg %p24
  $region31: #{bert_forward.12} parent=0 // pred_check_branch
    %93 = sbr.rel (%p91) target = $region33
  $region32: #{bert_forward.12} parent=0 // pred_region
    %v94 = vld [vmem:[#allocation2] sm:$0xff]
    %v95 = vld [vmem:[#allocation2 + $0x8] sm:$0xff]
    %v96 = vld [vmem:[%s2] sm:$0x1]
    %v98 = vlaneseq
    %v99 = vshrl.u32 %v98, 7
    %v100 = vsub.s32 0, %v99
    %v101 = vrot.slane %v96, %v100
    %v103 = vadd.f32 %v94, %v101
    %v104 = vadd.f32 %v95, %v101
    %v105 = vld [vmem:[%s3] sm:$0xff]
    %v106 = vld [vmem:[%s3 + $0x8] sm:$0xff]
    %v107 = vadd.f32 %v103, %v105
    %v108 = vadd.f32 %v104, %v106
    %v109 = vsel %vm42, %v107, 0.0
    %110 = vadd.xlane.f32.xlu0 %v109
    %v111 = vpop.xlane.xlu0 %110
    %v112 = vsel %vm42, %v108, 0.0
    %113 = vadd.xlane.f32.xlu0 %v112
    %v114 = vpop.xlane.xlu0 %113
    %v115 = vrcp.pop 32.0
    %v116 = vmul.f32 %v111, %v115
    %v117 = vmul.f32 %v114, %v115
    %v118 = vsub.f32 %v107, %v116
    %v119 = vsub.f32 %v108, %v117
    %v120 = vmul.f32 %v118, %v118
    %v121 = vmul.f32 %v119, %v119
    %v122 = vsel %vm42, %v120, 0.0
    %123 = vadd.xlane.f32.xlu0 %v122
    %v124 = vpop.xlane.xlu0 %123
    %v125 = vsel %vm42, %v121, 0.0
    %126 = vadd.xlane.f32.xlu0 %v125
    %v127 = vpop.xlane.xlu0 %126
    %v128 = vmul.f32 %v124, %v115
    %v129 = vmul.f32 %v127, %v115
    %v130 = vadd.f32 %v128, 1e-06
    %v131 = vadd.f32 %v129, 1e-06
    %v132 = vrsqrt.pop %v130
    %v133 = vrsqrt.pop %v131
    %v134 = vmul.f32 %v118, %v132
    %v135 = vmul.f32 %v119, %v133
    %v136 = vld [vmem:[%s4] sm:$0x1]
    %v138 = vlaneseq
    %v139 = vshrl.u32 %v138, 7
    %v140 = vsub.s32 0, %v139
    %v141 = vrot.slane %v136, %v140
    %v143 = vmul.f32 %v134, %v141
    %v144 = vmul.f32 %v135, %v141
    %v145 = vld [vmem:[%s5] sm:$0x1]
    %v147 = vlaneseq
    %v148 = vshrl.u32 %v147, 7
    %v149 = vsub.s32 0, %v148
    %v150 = vrot.slane %v145, %v149
    %v152 = vadd.f32 %v143, %v150
    %v153 = vadd.f32 %v144, %v150
    %154 = vst.msk [vmem:[%s6] sm:$0xff] %vm42, %v152
    %155 = vst.msk [vmem:[%s6 + $0x8] sm:$0xff] %vm42, %v153
  $region33: #{bert_forward.12} parent=0 // pred_fallthru
    _
  // Predicated region
  $region34: #{bert_forward.12} parent=0 // pred_check
    _
  $region35: #{bert_forward.12} parent=0 // pred_check_branch
    %157 = sbr.rel (0) target = $region37
  $region36: #{bert_forward.12} parent=0 // pred_region
    _
  $region37: #{bert_forward.12} parent=0 // pred_fallthru
    _
  // Predicated region
  $region38: #{bert_forward.12} parent=0 // pred_check
    _
  $region39: #{bert_forward.12} parent=0 // pred_check_branch
    %159 = sbr.rel (0) target = $region41
  $region40: #{bert_forward.12} parent=0 // pred_region
    _
  $region41: #{bert_forward.12} parent=0 // pred_fallthru
    _

// kernel: bert_forward.11
$region0: #{bert_forward.11}
  #allocation0 [shape = 'u32[]', space=smem, size = 0x4, offset = 0x4, fixed_abs, tag = 'smem constant byte address 0x4 - core index']
  #allocation1 [shape = 'u32[144,128]{1,0:T(1,128)}', space=vmem, size = 0x12000, scoped, tag = 'internal scratch']
  %s0 = inlined_call_operand.vmem [shape: f32[2,8,96], index: 0, kind: input, shape index: {}]
  %s1 = inlined_call_operand.vmem [shape: s32[2,1,8], index: 1, kind: input, shape index: {}]
  %s2 = inlined_call_operand.vmem [shape: f32[2,8,32], index: 2, kind: output, shape index: {}]
  %s3 = sld [smem:[#allocation0]]
  $region41: #{bert_forward.11} parent=0
    _
  %s5 = ssub.s32 1, %s3
  %s6 = scalar_select 0, %s5, %s3
  loop: start=0, step=1, limit=4
  $region2: #{bert_forward.11} parent=0 // loop_pre_header
    _
  $region3: #{bert_forward.11} parent=0 // loop_header
    %s8 = sphi 0, %s12
    %p9 = scmp.ge.s32.totalorder %s8, 4
    %s18 = sphi 0, %s20
    %s21 = sphi 0, %s18
    %s22 = sphi 0, %s21
    %s38 = sphi 0, %s22
    %s44 = sphi 0, %s46
    %s47 = sphi 0, %s44
    %s48 = sphi 0, %s47
    %s64 = sphi 0, %s48
    %s70 = sphi 0, %s72
    %s73 = sphi 0, %s70
    %s74 = sphi 0, %s73
    %s90 = sphi 0, %s74
  $region4: #{bert_forward.11} parent=0 // loop_header_branch
    %11 = sbr.rel (%p9) target = $region8
  $region5: #{bert_forward.11} parent=0 // loop_body
    %s13 = ssub.s32 %s8, 1
    %s14 = ssub.s32 %s8, 2
    %s15 = sadd.s32 %s8, 1
    %s16 = ssub.s32 %s8, %s15
    %p17 = scmp.eq.s32.totalorder %s16, 0
    %s19 = sadd.s32 %s18, 1
    %s20 = scalar_select %p17, %s18, %s19
    %p23 = pneg %p17
    %p24 = scmp.eq.s32.totalorder %s8, 1
    %p25 = por %p23, %p24
    %p26 = scmp.ne.s32.totalorder %s18, %s21
    %p27 = scmp.eq.s32.totalorder %s8, 0
    %p28 = por %p26, %p27
    %p29 = scmp.ne.s32.totalorder %s18, %s21
    %p30 = scmp.eq.s32.totalorder %s13, 1
    %p31 = por %p29, %p30
    %p32 = scmp.ne.s32.totalorder %s21, %s22
    %p33 = scmp.eq.s32.totalorder %s13, 0
    %p34 = por %p32, %p33
    %p35 = scmp.ne.s32.totalorder %s21, %s22
    %p36 = scmp.eq.s32.totalorder %s14, 1
    %p37 = por %p35, %p36
    %p39 = scmp.ne.s32.totalorder %s22, %s38
    %p40 = scmp.eq.s32.totalorder %s14, 0
    %p41 = por %p39, %p40
    %s42 = ssub.s32 %s8, %s15
    %p43 = scmp.eq.s32.totalorder %s42, 0
    %s45 = sadd.s32 %s44, 1
    %s46 = scalar_select %p43, %s44, %s45
    %p49 = pneg %p43
    %p50 = scmp.eq.s32.totalorder %s8, 1
    %p51 = por %p49, %p50
    %p52 = scmp.ne.s32.totalorder %s44, %s47
    %p53 = scmp.eq.s32.totalorder %s8, 0
    %p54 = por %p52, %p53
    %p55 = scmp.ne.s32.totalorder %s44, %s47
    %p56 = scmp.eq.s32.totalorder %s13, 1
    %p57 = por %p55, %p56
    %p58 = scmp.ne.s32.totalorder %s47, %s48
    %p59 = scmp.eq.s32.totalorder %s13, 0
    %p60 = por %p58, %p59
    %p61 = scmp.ne.s32.totalorder %s47, %s48
    %p62 = scmp.eq.s32.totalorder %s14, 1
    %p63 = por %p61, %p62
    %p65 = scmp.ne.s32.totalorder %s48, %s64
    %p66 = scmp.eq.s32.totalorder %s14, 0
    %p67 = por %p65, %p66
    %s68 = ssub.s32 %s8, %s15
    %p69 = scmp.eq.s32.totalorder %s68, 0
    %s71 = sadd.s32 %s70, 1
    %s72 = scalar_select %p69, %s70, %s71
    %p75 = pneg %p69
    %p76 = scmp.eq.s32.totalorder %s8, 1
    %p77 = por %p75, %p76
    %p78 = scmp.ne.s32.totalorder %s70, %s73
    %p79 = scmp.eq.s32.totalorder %s8, 0
    %p80 = por %p78, %p79
    %p81 = scmp.ne.s32.totalorder %s70, %s73
    %p82 = scmp.eq.s32.totalorder %s13, 1
    %p83 = por %p81, %p82
    %p84 = scmp.ne.s32.totalorder %s73, %s74
    %p85 = scmp.eq.s32.totalorder %s13, 0
    %p86 = por %p84, %p85
    %p87 = scmp.ne.s32.totalorder %s73, %s74
    %p88 = scmp.eq.s32.totalorder %s14, 1
    %p89 = por %p87, %p88
    %p91 = scmp.ne.s32.totalorder %s74, %s90
    %p92 = scmp.eq.s32.totalorder %s14, 0
    %p93 = por %p91, %p92
    %p94 = scmp.le.s32.totalorder 1, %s8
    %p95 = scmp.lt.s32.totalorder %s8, 3
    %p96 = pnand %p94, %p95
    %p97 = pneg %p96
    // Predicated region
    $region9: #{bert_forward.11} parent=5 // pred_check
      _
    $region10: #{bert_forward.11} parent=5 // pred_check_branch
      %99 = sbr.rel (%p96) target = $region12
    $region11: #{bert_forward.11} parent=5 // pred_region
      %s100 = ssub.s32 %s8, 1
    $region12: #{bert_forward.11} parent=5 // pred_fallthru
      _
    %p101 = scmp.lt.s32.totalorder %s8, 2
    // Predicated region
    $region13: #{bert_forward.11} parent=5 // pred_check
      %p102 = pneg %p101
    $region14: #{bert_forward.11} parent=5 // pred_check_branch
      %104 = sbr.rel (%p102) target = $region16
    $region15: #{bert_forward.11} parent=5 // pred_region
      // Predicated region
      $region17: #{bert_forward.11} parent=15 // pred_check
        %p105 = pneg %p28
      $region18: #{bert_forward.11} parent=15 // pred_check_branch
        %107 = sbr.rel (%p105) target = $region20
      $region19: #{bert_forward.11} parent=15 // pred_region
        %p108 = scmp.lt.s32.totalorder %s8, 1
        %s109 = scalar_select %p108, %s8, 1
        %s110 = smul.addr %s109, 8
        %s111 = scalar_lea.vmem %s0, %s110
      $region20: #{bert_forward.11} parent=15 // pred_fallthru
        _
      // Predicated region
      $region21: #{bert_forward.11} parent=15 // pred_check
        %p112 = pneg %p54
      $region22: #{bert_forward.11} parent=15 // pred_check_branch
        %114 = sbr.rel (%p112) target = $region24
      $region23: #{bert_forward.11} parent=15 // pred_region
        %p115 = scmp.lt.s32.totalorder %s8, 1
        %s116 = scalar_select %p115, %s8, 1
        %s117 = scalar_lea.vmem %s1, %s116
      $region24: #{bert_forward.11} parent=15 // pred_fallthru
        _
    $region16: #{bert_forward.11} parent=5 // pred_fallthru
      _
    %p118 = scmp.le.s32.totalorder 1, %s8
    %p119 = scmp.lt.s32.totalorder %s8, 3
    %p120 = pnand %p118, %p119
    %p121 = pneg %p120
    // Predicated region
    $region25: #{bert_forward.11} parent=5 // pred_check
      _
    $region26: #{bert_forward.11} parent=5 // pred_check_branch
      %123 = sbr.rel (%p120) target = $region28
    $region27: #{bert_forward.11} parent=5 // pred_region
      %s124 = ssub.s32 %s8, 1
      %p125 = scmp.lt.s32.totalorder %s13, 1
      %s126 = scalar_select %p125, %s13, 1
      %s127 = smul.addr %s126, 8
      %s128 = scalar_lea.vmem %s0, %s127
      %p129 = pneg %p34
      %p130 = pneg %p31
      %p131 = scmp.lt.s32.totalorder %s13, 1
      %s132 = scalar_select %p131, %s13, 1
      %s133 = scalar_lea.vmem %s1, %s132
      %p134 = pneg %p60
      %p135 = pneg %p57
      %p136 = pneg %p86
      %p137 = pneg %p83
      %p138 = scmp.lt.s32.totalorder %s13, 1
      %s139 = scalar_select %p138, %s13, 1
      %s140 = smul.addr %s139, 8
      %s141 = scalar_lea.vmem %s2, %s140
      %p142 = scmp.lt.s32.totalorder %s13, 1
      %s143 = scalar_select %p142, %s13, 1
      %s144 = smul.addr %s143, 8
      %s145 = scalar_lea.vmem %s0, %s144
      %p146 = scmp.lt.s32.totalorder %s13, 1
      %s147 = scalar_select %p146, %s13, 1
      %s148 = scalar_lea.vmem %s1, %s147
      %p149 = scmp.lt.s32.totalorder %s13, 1
      %s150 = scalar_select %p149, %s13, 1
      %s151 = smul.addr %s150, 8
      %s152 = scalar_lea.vmem %s2, %s151
      %v154 = vld [vmem:[%s145] sm:$0xff]
      %v155 = vld [vmem:[%s148] sm:$0x1]
      %vm156 = vcmp.gt.s32.totalorder %v155, 0
      %v157 = vmul.f32 %v154, 0.35355338
      %v158 = vpack.c.bf16 %v157, %v157
      %v159 = vpack.c.bf16 %v154, %v154
      %161 = vrot.lane.b32.xlu0 %v159, 96
      %v162 = vpop.permute.xlu0 %161
      %vm163 = vcmask 64512
      %v165 = vsel %vm163, %v158, 0
      %v168 = vsel %vm163, %v162, 0
      %170 = vmatprep.subr.bf16.mxu0 0
      %171 = vmatpush1.bf16.xpose.msra.mxu0 0
      %172 = vmatprep.subr.bf16.mxu0 0
      %173 = vmatpush1.bf16.xpose.msra.mxu0 0
      %174 = vmatprep.subr.bf16.mxu0 0
      %175 = vmatpush1.bf16.xpose.msra.mxu0 0
      %176 = vmatprep.subr.bf16.mxu0 0
      %177 = vmatpush1.bf16.xpose.msra.mxu0 0
      %178 = vmatprep.subr.bf16.mxu0 0
      %179 = vmatpush1.bf16.xpose.msra.mxu0 0
      %180 = vmatprep.subr.bf16.mxu0 0
      %181 = vmatpush1.bf16.xpose.msra.mxu0 0
      %182 = vmatprep.subr.bf16.mxu0 0
      %183 = vmatpush1.bf16.xpose.msra.mxu0 0
      %184 = vmatprep.subr.bf16.mxu0 0
      %185 = vmatpush1.bf16.xpose.msra.mxu0 %v168
      %186 = vmatprep.subr.bf16.mxu0 0
      %187 = vmatpush2.bf16.xpose.msra.mxu0 0
      %188 = vmatprep.subr.bf16.mxu0 0
      %189 = vmatpush2.bf16.xpose.msra.mxu0 0
      %190 = vmatprep.subr.bf16.mxu0 0
      %191 = vmatpush2.bf16.xpose.msra.mxu0 0
      %192 = vmatprep.subr.bf16.mxu0 0
      %193 = vmatpush2.bf16.xpose.msra.mxu0 0
      %194 = vmatprep.subr.bf16.mxu0 0
      %195 = vmatpush2.bf16.xpose.msra.mxu0 0
      %196 = vmatprep.subr.bf16.mxu0 0
      %197 = vmatpush2.bf16.xpose.msra.mxu0 0
      %198 = vmatprep.subr.bf16.mxu0 0
      %199 = vmatpush2.bf16.xpose.msra.mxu0 0
      %200 = vmatprep.subr.bf16.mxu0 0
      %201 = vmatpush2.bf16.xpose.msra.mxu0 0
      %202 = vmatprep.mubr.bf16.mxu0 0
      %203 = vmatmul.mubr.bf16.gmra.mxu0 %v165
      %v204 = vpop.f32.mrf.mxu0
      %v205 = vadd.f32 0.0, %v204
      %v206 = vpop.f32.mrf.mxu0
      %v207 = vpop.f32.mrf.mxu0
      %v208 = vpop.f32.mrf.mxu0
      %209 = vdwg.mxu0
      %v210 = vsel %vm156, 1, 0
      %v211 = vlaneseq
      %v212 = vshrl.u32 %v211, 7
      %v213 = vsub.s32 0, %v212
      %v214 = vrot.slane %v210, %v213
      %vm215 = vcmp.eq.s32.totalorder %v214, 1
      %v216 = vsel %vm215, %v205, -1e+09
      %v217 = vsel %vm163, %v216, -inf
      %218 = vmax.xlane.f32.xlu0 %v217
      %v219 = vpop.xlane.xlu0 %218
      %v220 = vsub.f32 %v216, %v219
      %v221 = vmul.f32 %v220, 1.442695
      %v222 = vpow.pop %v221
      %v223 = vsel %vm163, %v222, 0.0
      %224 = vadd.xlane.f32.xlu0 %v223
      %v225 = vpop.xlane.xlu0 %224
      %v226 = vrcp.pop %v225
      %v227 = vmul.f32 %v222, %v226
      %v228 = vpack.c.bf16 %v227, %v227
      %229 = vrot.lane.b32.xlu0 %v159, 64
      %v230 = vpop.permute.xlu0 %229
      %v232 = vsel %vm163, %v228, 0
      %vm234 = vcmask 1043456
      %v236 = vsel %vm234, %v230, 0
      %238 = vmatprep.subr.bf16.mxu0 0
      %239 = vmatpush1.bf16.msra.mxu0 0
      %240 = vmatprep.subr.bf16.mxu0 0
      %241 = vmatpush1.bf16.msra.mxu0 0
      %242 = vmatprep.subr.bf16.mxu0 0
      %243 = vmatpush1.bf16.msra.mxu0 0
      %244 = vmatprep.subr.bf16.mxu0 0
      %245 = vmatpush1.bf16.msra.mxu0 0
      %246 = vmatprep.subr.bf16.mxu0 0
      %247 = vmatpush1.bf16.msra.mxu0 0
      %248 = vmatprep.subr.bf16.mxu0 0
      %249 = vmatpush1.bf16.msra.mxu0 0
      %250 = vmatprep.subr.bf16.mxu0 0
      %251 = vmatpush1.bf16.msra.mxu0 0
      %252 = vmatprep.subr.bf16.mxu0 0
      %253 = vmatpush1.bf16.msra.mxu0 %v236
      %254 = vmatprep.subr.bf16.mxu0 0
      %255 = vmatpush2.bf16.msra.mxu0 0
      %256 = vmatprep.subr.bf16.mxu0 0
      %257 = vmatpush2.bf16.msra.mxu0 0
      %258 = vmatprep.subr.bf16.mxu0 0
      %259 = vmatpush2.bf16.msra.mxu0 0
      %260 = vmatprep.subr.bf16.mxu0 0
      %261 = vmatpush2.bf16.msra.mxu0 0
      %262 = vmatprep.subr.bf16.mxu0 0
      %263 = vmatpush2.bf16.msra.mxu0 0
      %264 = vmatprep.subr.bf16.mxu0 0
      %265 = vmatpush2.bf16.msra.mxu0 0
      %266 = vmatprep.subr.bf16.mxu0 0
      %267 = vmatpush2.bf16.msra.mxu0 0
      %268 = vmatprep.subr.bf16.mxu0 0
      %269 = vmatpush2.bf16.msra.mxu0 0
      %270 = vmatprep.mubr.bf16.mxu0 0
      %271 = vmatmul.mubr.bf16.gmra.mxu0 %v232
      %v272 = vpop.f32.mrf.mxu0
      %v273 = vadd.f32 0.0, %v272
      %v274 = vpop.f32.mrf.mxu0
      %v275 = vpop.f32.mrf.mxu0
      %v276 = vpop.f32.mrf.mxu0
      %277 = vdwg.mxu0
      %279 = vrot.lane.b32.xlu0 %v158, 120
      %v280 = vpop.permute.xlu0 %279
      %281 = vrot.lane.b32.xlu0 %v159, 88
      %v282 = vpop.permute.xlu0 %281
      %v284 = vsel %vm163, %v280, 0
      %v287 = vsel %vm163, %v282, 0
      %289 = vmatprep.subr.bf16.mxu0 0
      %290 = vmatpush1.bf16.xpose.msra.mxu0 0
      %291 = vmatprep.subr.bf16.mxu0 0
      %292 = vmatpush1.bf16.xpose.msra.mxu0 0
      %293 = vmatprep.subr.bf16.mxu0 0
      %294 = vmatpush1.bf16.xpose.msra.mxu0 0
      %295 = vmatprep.subr.bf16.mxu0 0
      %296 = vmatpush1.bf16.xpose.msra.mxu0 0
      %297 = vmatprep.subr.bf16.mxu0 0
      %298 = vmatpush1.bf16.xpose.msra.mxu0 0
      %299 = vmatprep.subr.bf16.mxu0 0
      %300 = vmatpush1.bf16.xpose.msra.mxu0 0
      %301 = vmatprep.subr.bf16.mxu0 0
      %302 = vmatpush1.bf16.xpose.msra.mxu0 0
      %303 = vmatprep.subr.bf16.mxu0 0
      %304 = vmatpush1.bf16.xpose.msra.mxu0 %v287
      %305 = vmatprep.subr.bf16.mxu0 0
      %306 = vmatpush2.bf16.xpose.msra.mxu0 0
      %307 = vmatprep.subr.bf16.mxu0 0
      %308 = vmatpush2.bf16.xpose.msra.mxu0 0
      %309 = vmatprep.subr.bf16.mxu0 0
      %310 = vmatpush2.bf16.xpose.msra.mxu0 0
      %311 = vmatprep.subr.bf16.mxu0 0
      %312 = vmatpush2.bf16.xpose.msra.mxu0 0
      %313 = vmatprep.subr.bf16.mxu0 0
      %314 = vmatpush2.bf16.xpose.msra.mxu0 0
      %315 = vmatprep.subr.bf16.mxu0 0
      %316 = vmatpush2.bf16.xpose.msra.mxu0 0
      %317 = vmatprep.subr.bf16.mxu0 0
      %318 = vmatpush2.bf16.xpose.msra.mxu0 0
      %319 = vmatprep.subr.bf16.mxu0 0
      %320 = vmatpush2.bf16.xpose.msra.mxu0 0
      %321 = vmatprep.mubr.bf16.mxu0 0
      %322 = vmatmul.mubr.bf16.gmra.mxu0 %v284
      %v323 = vpop.f32.mrf.mxu0
      %v324 = vadd.f32 0.0, %v323
      %v325 = vpop.f32.mrf.mxu0
      %v326 = vpop.f32.mrf.mxu0
      %v327 = vpop.f32.mrf.mxu0
      %328 = vdwg.mxu0
      %v329 = vsel %vm215, %v324, -1e+09
      %v330 = vsel %vm163, %v329, -inf
      %331 = vmax.xlane.f32.xlu0 %v330
      %v332 = vpop.xlane.xlu0 %331
      %v333 = vsub.f32 %v329, %v332
      %v334 = vmul.f32 %v333, 1.442695
      %v335 = vpow.pop %v334
      %v336 = vsel %vm163, %v335, 0.0
      %337 = vadd.xlane.f32.xlu0 %v336
      %v338 = vpop.xlane.xlu0 %337
      %v339 = vrcp.pop %v338
      %v340 = vmul.f32 %v335, %v339
      %v341 = vpack.c.bf16 %v340, %v340
      %342 = vrot.lane.b32.xlu0 %v159, 56
      %v343 = vpop.permute.xlu0 %342
      %v345 = vsel %vm163, %v341, 0
      %v348 = vsel %vm234, %v343, 0
      %350 = vmatprep.subr.bf16.mxu0 0
      %351 = vmatpush1.bf16.msra.mxu0 0
      %352 = vmatprep.subr.bf16.mxu0 0
      %353 = vmatpush1.bf16.msra.mxu0 0
      %354 = vmatprep.subr.bf16.mxu0 0
      %355 = vmatpush1.bf16.msra.mxu0 0
      %356 = vmatprep.subr.bf16.mxu0 0
      %357 = vmatpush1.bf16.msra.mxu0 0
      %358 = vmatprep.subr.bf16.mxu0 0
      %359 = vmatpush1.bf16.msra.mxu0 0
      %360 = vmatprep.subr.bf16.mxu0 0
      %361 = vmatpush1.bf16.msra.mxu0 0
      %362 = vmatprep.subr.bf16.mxu0 0
      %363 = vmatpush1.bf16.msra.mxu0 0
      %364 = vmatprep.subr.bf16.mxu0 0
      %365 = vmatpush1.bf16.msra.mxu0 %v348
      %366 = vmatprep.subr.bf16.mxu0 0
      %367 = vmatpush2.bf16.msra.mxu0 0
      %368 = vmatprep.subr.bf16.mxu0 0
      %369 = vmatpush2.bf16.msra.mxu0 0
      %370 = vmatprep.subr.bf16.mxu0 0
      %371 = vmatpush2.bf16.msra.mxu0 0
      %372 = vmatprep.subr.bf16.mxu0 0
      %373 = vmatpush2.bf16.msra.mxu0 0
      %374 = vmatprep.subr.bf16.mxu0 0
      %375 = vmatpush2.bf16.msra.mxu0 0
      %376 = vmatprep.subr.bf16.mxu0 0
      %377 = vmatpush2.bf16.msra.mxu0 0
      %378 = vmatprep.subr.bf16.mxu0 0
      %379 = vmatpush2.bf16.msra.mxu0 0
      %380 = vmatprep.subr.bf16.mxu0 0
      %381 = vmatpush2.bf16.msra.mxu0 0
      %382 = vmatprep.mubr.bf16.mxu0 0
      %383 = vmatmul.mubr.bf16.gmra.mxu0 %v345
      %v384 = vpop.f32.mrf.mxu0
      %v385 = vadd.f32 0.0, %v384
      %v386 = vpop.f32.mrf.mxu0
      %v387 = vpop.f32.mrf.mxu0
      %v388 = vpop.f32.mrf.mxu0
      %389 = vdwg.mxu0
      %390 = vrot.lane.b32.xlu0 %v158, 112
      %v391 = vpop.permute.xlu0 %390
      %392 = vrot.lane.b32.xlu0 %v159, 80
      %v393 = vpop.permute.xlu0 %392
      %v395 = vsel %vm163, %v391, 0
      %v398 = vsel %vm163, %v393, 0
      %400 = vmatprep.subr.bf16.mxu0 0
      %401 = vmatpush1.bf16.xpose.msra.mxu0 0
      %402 = vmatprep.subr.bf16.mxu0 0
      %403 = vmatpush1.bf16.xpose.msra.mxu0 0
      %404 = vmatprep.subr.bf16.mxu0 0
      %405 = vmatpush1.bf16.xpose.msra.mxu0 0
      %406 = vmatprep.subr.bf16.mxu0 0
      %407 = vmatpush1.bf16.xpose.msra.mxu0 0
      %408 = vmatprep.subr.bf16.mxu0 0
      %409 = vmatpush1.bf16.xpose.msra.mxu0 0
      %410 = vmatprep.subr.bf16.mxu0 0
      %411 = vmatpush1.bf16.xpose.msra.mxu0 0
      %412 = vmatprep.subr.bf16.mxu0 0
      %413 = vmatpush1.bf16.xpose.msra.mxu0 0
      %414 = vmatprep.subr.bf16.mxu0 0
      %415 = vmatpush1.bf16.xpose.msra.mxu0 %v398
      %416 = vmatprep.subr.bf16.mxu0 0
      %417 = vmatpush2.bf16.xpose.msra.mxu0 0
      %418 = vmatprep.subr.bf16.mxu0 0
      %419 = vmatpush2.bf16.xpose.msra.mxu0 0
      %420 = vmatprep.subr.bf16.mxu0 0
      %421 = vmatpush2.bf16.xpose.msra.mxu0 0
      %422 = vmatprep.subr.bf16.mxu0 0
      %423 = vmatpush2.bf16.xpose.msra.mxu0 0
      %424 = vmatprep.subr.bf16.mxu0 0
      %425 = vmatpush2.bf16.xpose.msra.mxu0 0
      %426 = vmatprep.subr.bf16.mxu0 0
      %427 = vmatpush2.bf16.xpose.msra.mxu0 0
      %428 = vmatprep.subr.bf16.mxu0 0
      %429 = vmatpush2.bf16.xpose.msra.mxu0 0
      %430 = vmatprep.subr.bf16.mxu0 0
      %431 = vmatpush2.bf16.xpose.msra.mxu0 0
      %432 = vmatprep.mubr.bf16.mxu0 0
      %433 = vmatmul.mubr.bf16.gmra.mxu0 %v395
      %v434 = vpop.f32.mrf.mxu0
      %v435 = vadd.f32 0.0, %v434
      %v436 = vpop.f32.mrf.mxu0
      %v437 = vpop.f32.mrf.mxu0
      %v438 = vpop.f32.mrf.mxu0
      %439 = vdwg.mxu0
      %v440 = vsel %vm215, %v435, -1e+09
      %v441 = vsel %vm163, %v440, -inf
      %442 = vmax.xlane.f32.xlu0 %v441
      %v443 = vpop.xlane.xlu0 %442
      %v444 = vsub.f32 %v440, %v443
      %v445 = vmul.f32 %v444, 1.442695
      %v446 = vpow.pop %v445
      %v447 = vsel %vm163, %v446, 0.0
      %448 = vadd.xlane.f32.xlu0 %v447
      %v449 = vpop.xlane.xlu0 %448
      %v450 = vrcp.pop %v449
      %v451 = vmul.f32 %v446, %v450
      %v452 = vpack.c.bf16 %v451, %v451
      %453 = vrot.lane.b32.xlu0 %v159, 48
      %v454 = vpop.permute.xlu0 %453
      %v456 = vsel %vm163, %v452, 0
      %v459 = vsel %vm234, %v454, 0
      %461 = vmatprep.subr.bf16.mxu0 0
      %462 = vmatpush1.bf16.msra.mxu0 0
      %463 = vmatprep.subr.bf16.mxu0 0
      %464 = vmatpush1.bf16.msra.mxu0 0
      %465 = vmatprep.subr.bf16.mxu0 0
      %466 = vmatpush1.bf16.msra.mxu0 0
      %467 = vmatprep.subr.bf16.mxu0 0
      %468 = vmatpush1.bf16.msra.mxu0 0
      %469 = vmatprep.subr.bf16.mxu0 0
      %470 = vmatpush1.bf16.msra.mxu0 0
      %471 = vmatprep.subr.bf16.mxu0 0
      %472 = vmatpush1.bf16.msra.mxu0 0
      %473 = vmatprep.subr.bf16.mxu0 0
      %474 = vmatpush1.bf16.msra.mxu0 0
      %475 = vmatprep.subr.bf16.mxu0 0
      %476 = vmatpush1.bf16.msra.mxu0 %v459
      %477 = vmatprep.subr.bf16.mxu0 0
      %478 = vmatpush2.bf16.msra.mxu0 0
      %479 = vmatprep.subr.bf16.mxu0 0
      %480 = vmatpush2.bf16.msra.mxu0 0
      %481 = vmatprep.subr.bf16.mxu0 0
      %482 = vmatpush2.bf16.msra.mxu0 0
      %483 = vmatprep.subr.bf16.mxu0 0
      %484 = vmatpush2.bf16.msra.mxu0 0
      %485 = vmatprep.subr.bf16.mxu0 0
      %486 = vmatpush2.bf16.msra.mxu0 0
      %487 = vmatprep.subr.bf16.mxu0 0
      %488 = vmatpush2.bf16.msra.mxu0 0
      %489 = vmatprep.subr.bf16.mxu0 0
      %490 = vmatpush2.bf16.msra.mxu0 0
      %491 = vmatprep.subr.bf16.mxu0 0
      %492 = vmatpush2.bf16.msra.mxu0 0
      %493 = vmatprep.mubr.bf16.mxu0 0
      %494 = vmatmul.mubr.bf16.gmra.mxu0 %v456
      %v495 = vpop.f32.mrf.mxu0
      %v496 = vadd.f32 0.0, %v495
      %v497 = vpop.f32.mrf.mxu0
      %v498 = vpop.f32.mrf.mxu0
      %v499 = vpop.f32.mrf.mxu0
      %500 = vdwg.mxu0
      %501 = vrot.lane.b32.xlu0 %v158, 104
      %v502 = vpop.permute.xlu0 %501
      %503 = vrot.lane.b32.xlu0 %v159, 72
      %v504 = vpop.permute.xlu0 %503
      %v506 = vsel %vm163, %v502, 0
      %v509 = vsel %vm163, %v504, 0
      %511 = vmatprep.subr.bf16.mxu0 0
      %512 = vmatpush1.bf16.xpose.msra.mxu0 0
      %513 = vmatprep.subr.bf16.mxu0 0
      %514 = vmatpush1.bf16.xpose.msra.mxu0 0
      %515 = vmatprep.subr.bf16.mxu0 0
      %516 = vmatpush1.bf16.xpose.msra.mxu0 0
      %517 = vmatprep.subr.bf16.mxu0 0
      %518 = vmatpush1.bf16.xpose.msra.mxu0 0
      %519 = vmatprep.subr.bf16.mxu0 0
      %520 = vmatpush1.bf16.xpose.msra.mxu0 0
      %521 = vmatprep.subr.bf16.mxu0 0
      %522 = vmatpush1.bf16.xpose.msra.mxu0 0
      %523 = vmatprep.subr.bf16.mxu0 0
      %524 = vmatpush1.bf16.xpose.msra.mxu0 0
      %525 = vmatprep.subr.bf16.mxu0 0
      %526 = vmatpush1.bf16.xpose.msra.mxu0 %v509
      %527 = vmatprep.subr.bf16.mxu0 0
      %528 = vmatpush2.bf16.xpose.msra.mxu0 0
      %529 = vmatprep.subr.bf16.mxu0 0
      %530 = vmatpush2.bf16.xpose.msra.mxu0 0
      %531 = vmatprep.subr.bf16.mxu0 0
      %532 = vmatpush2.bf16.xpose.msra.mxu0 0
      %533 = vmatprep.subr.bf16.mxu0 0
      %534 = vmatpush2.bf16.xpose.msra.mxu0 0
      %535 = vmatprep.subr.bf16.mxu0 0
      %536 = vmatpush2.bf16.xpose.msra.mxu0 0
      %537 = vmatprep.subr.bf16.mxu0 0
      %538 = vmatpush2.bf16.xpose.msra.mxu0 0
      %539 = vmatprep.subr.bf16.mxu0 0
      %540 = vmatpush2.bf16.xpose.msra.mxu0 0
      %541 = vmatprep.subr.bf16.mxu0 0
      %542 = vmatpush2.bf16.xpose.msra.mxu0 0
      %543 = vmatprep.mubr.bf16.mxu0 0
      %544 = vmatmul.mubr.bf16.gmra.mxu0 %v506
      %v545 = vpop.f32.mrf.mxu0
      %v546 = vadd.f32 0.0, %v545
      %v547 = vpop.f32.mrf.mxu0
      %v548 = vpop.f32.mrf.mxu0
      %v549 = vpop.f32.mrf.mxu0
      %550 = vdwg.mxu0
      %v551 = vsel %vm215, %v546, -1e+09
      %v552 = vsel %vm163, %v551, -inf
      %553 = vmax.xlane.f32.xlu0 %v552
      %v554 = vpop.xlane.xlu0 %553
      %v555 = vsub.f32 %v551, %v554
      %v556 = vmul.f32 %v555, 1.442695
      %v557 = vpow.pop %v556
      %v558 = vsel %vm163, %v557, 0.0
      %559 = vadd.xlane.f32.xlu0 %v558
      %v560 = vpop.xlane.xlu0 %559
      %v561 = vrcp.pop %v560
      %v562 = vmul.f32 %v557, %v561
      %v563 = vpack.c.bf16 %v562, %v562
      %564 = vrot.lane.b32.xlu0 %v159, 40
      %v565 = vpop.permute.xlu0 %564
      %v567 = vsel %vm163, %v563, 0
      %v570 = vsel %vm234, %v565, 0
      %572 = vmatprep.subr.bf16.mxu0 0
      %573 = vmatpush1.bf16.msra.mxu0 0
      %574 = vmatprep.subr.bf16.mxu0 0
      %575 = vmatpush1.bf16.msra.mxu0 0
      %576 = vmatprep.subr.bf16.mxu0 0
      %577 = vmatpush1.bf16.msra.mxu0 0
      %578 = vmatprep.subr.bf16.mxu0 0
      %579 = vmatpush1.bf16.msra.mxu0 0
      %580 = vmatprep.subr.bf16.mxu0 0
      %581 = vmatpush1.bf16.msra.mxu0 0
      %582 = vmatprep.subr.bf16.mxu0 0
      %583 = vmatpush1.bf16.msra.mxu0 0
      %584 = vmatprep.subr.bf16.mxu0 0
      %585 = vmatpush1.bf16.msra.mxu0 0
      %586 = vmatprep.subr.bf16.mxu0 0
      %587 = vmatpush1.bf16.msra.mxu0 %v570
      %588 = vmatprep.subr.bf16.mxu0 0
      %589 = vmatpush2.bf16.msra.mxu0 0
      %590 = vmatprep.subr.bf16.mxu0 0
      %591 = vmatpush2.bf16.msra.mxu0 0
      %592 = vmatprep.subr.bf16.mxu0 0
      %593 = vmatpush2.bf16.msra.mxu0 0
      %594 = vmatprep.subr.bf16.mxu0 0
      %595 = vmatpush2.bf16.msra.mxu0 0
      %596 = vmatprep.subr.bf16.mxu0 0
      %597 = vmatpush2.bf16.msra.mxu0 0
      %598 = vmatprep.subr.bf16.mxu0 0
      %599 = vmatpush2.bf16.msra.mxu0 0
      %600 = vmatprep.subr.bf16.mxu0 0
      %601 = vmatpush2.bf16.msra.mxu0 0
      %602 = vmatprep.subr.bf16.mxu0 0
      %603 = vmatpush2.bf16.msra.mxu0 0
      %604 = vmatprep.mubr.bf16.mxu0 0
      %605 = vmatmul.mubr.bf16.gmra.mxu0 %v567
      %v606 = vpop.f32.mrf.mxu0
      %v607 = vadd.f32 0.0, %v606
      %v608 = vpop.f32.mrf.mxu0
      %v609 = vpop.f32.mrf.mxu0
      %v610 = vpop.f32.mrf.mxu0
      %611 = vdwg.mxu0
      %613 = vrot.lane.b32.xlu0 %v385, 8
      %v614 = vpop.permute.xlu0 %613
      %617 = vrot.lane.b32.xlu0 %v496, 16
      %v618 = vpop.permute.xlu0 %617
      %621 = vrot.lane.b32.xlu0 %v607, 24
      %v622 = vpop.permute.xlu0 %621
      %v624 = vsel %vm163, %v273, %v614
      %vm625 = vcmask 130048
      %v626 = vsel %vm625, %v624, %v618
      %vm627 = vcmask 195584
      %v628 = vsel %vm627, %v626, %v622
      %vm629 = vcmask 261120
      %630 = vst.msk [vmem:[%s152] sm:$0xff] %vm629, %v628
      %p631 = scmp.lt.s32.totalorder %s13, 1
      %s632 = scalar_select %p631, %s13, 1
      %s633 = smul.addr %s632, 8
      %s634 = scalar_lea.vmem %s2, %s633
      // Predicated region
      $region29: #{bert_forward.11} parent=27 // pred_check
        %p635 = pneg %p83
      $region30: #{bert_forward.11} parent=27 // pred_check_branch
        %637 = sbr.rel (%p635) target = $region32
      $region31: #{bert_forward.11} parent=27 // pred_region
        _
      $region32: #{bert_forward.11} parent=27 // pred_fallthru
        _
    $region28: #{bert_forward.11} parent=5 // pred_fallthru
      _
    %p638 = scmp.le.s32.totalorder 2, %s8
    // Predicated region
    $region33: #{bert_forward.11} parent=5 // pred_check
      %p639 = pneg %p638
    $region34: #{bert_forward.11} parent=5 // pred_check_branch
      %641 = sbr.rel (%p639) target = $region36
    $region35: #{bert_forward.11} parent=5 // pred_region
      %s642 = ssub.s32 %s8, 2
      // Predicated region
      $region37: #{bert_forward.11} parent=35 // pred_check
        %p643 = pneg %p89
      $region38: #{bert_forward.11} parent=35 // pred_check_branch
        %645 = sbr.rel (%p643) target = $region40
      $region39: #{bert_forward.11} parent=35 // pred_region
        %p646 = scmp.lt.s32.totalorder %s14, 1
        %s647 = scalar_select %p646, %s14, 1
        %s648 = smul.addr %s647, 8
        %s649 = scalar_lea.vmem %s2, %s648
      $region40: #{bert_forward.11} parent=35 // pred_fallthru
        _
    $region36: #{bert_forward.11} parent=5 // pred_fallthru
      _
  $region6: #{bert_forward.11} parent=0 // loop_footer
    %s12 = sadd.s32 1, %s8
  $region7: #{bert_forward.11} parent=0 // loop_footer_branch
    %7 = sbr.rel target = $region3
  $region8: #{bert_forward.11} parent=0 // loop_exit
    _

// kernel: bert_forward.14
$region0: #{bert_forward.14}
  #allocation0 [shape = 'u32[]', space=smem, size = 0x4, offset = 0x4, fixed_abs, tag = 'smem constant byte address 0x4 - core index']
  #allocation1 [shape = 'u32[144,128]{1,0:T(1,128)}', space=vmem, size = 0x12000, scoped, tag = 'internal scratch']
  #allocation2 [shape = 'f32[16,32]{1,0:T(8,128)}', space=vmem, size = 0x2000, scoped, tag = 'scratch operand']
  %s0 = inlined_call_operand.vmem [shape: f32[16,64], index: 0, kind: input, shape index: {}]
  %s1 = inlined_call_operand.vmem [shape: f32[64,32], index: 1, kind: input, shape index: {}]
  %s2 = inlined_call_operand.vmem [shape: f32[1,32], index: 2, kind: input, shape index: {}]
  %s3 = inlined_call_operand.vmem [shape: f32[16,32], index: 3, kind: input, shape index: {}]
  %s4 = inlined_call_operand.vmem [shape: f32[1,32], index: 4, kind: input, shape index: {}]
  %s5 = inlined_call_operand.vmem [shape: f32[1,32], index: 5, kind: input, shape index: {}]
  %s6 = inlined_call_operand.vmem [shape: f32[16,32], index: 6, kind: output, shape index: {}]
  %s7 = sld [smem:[#allocation0]]
  $region42: #{bert_forward.14} parent=0
    _
  %s9 = ssub.s32 1, %s7
  %s10 = scalar_select 0, %s9, %s7
  // Predicated region
  $region2: #{bert_forward.14} parent=0 // pred_check
    _
  $region3: #{bert_forward.14} parent=0 // pred_check_branch
    %12 = sbr.rel (0) target = $region5
  $region4: #{bert_forward.14} parent=0 // pred_region
    _
  $region5: #{bert_forward.14} parent=0 // pred_fallthru
    _
  // Predicated region
  $region6: #{bert_forward.14} parent=0 // pred_check
    _
  $region7: #{bert_forward.14} parent=0 // pred_check_branch
    %14 = sbr.rel (0) target = $region9
  $region8: #{bert_forward.14} parent=0 // pred_region
    _
  $region9: #{bert_forward.14} parent=0 // pred_fallthru
    _
  // Predicated region
  $region10: #{bert_forward.14} parent=0 // pred_check
    _
  $region11: #{bert_forward.14} parent=0 // pred_check_branch
    %16 = sbr.rel (0) target = $region13
  $region12: #{bert_forward.14} parent=0 // pred_region
    _
  $region13: #{bert_forward.14} parent=0 // pred_fallthru
    _
  // Predicated region
  $region14: #{bert_forward.14} parent=0 // pred_check
    _
  $region15: #{bert_forward.14} parent=0 // pred_check_branch
    %18 = sbr.rel (0) target = $region17
  $region16: #{bert_forward.14} parent=0 // pred_region
    _
  $region17: #{bert_forward.14} parent=0 // pred_fallthru
    _
  // Predicated region
  $region18: #{bert_forward.14} parent=0 // pred_check
    _
  $region19: #{bert_forward.14} parent=0 // pred_check_branch
    %20 = sbr.rel (0) target = $region21
  $region20: #{bert_forward.14} parent=0 // pred_region
    _
  $region21: #{bert_forward.14} parent=0 // pred_fallthru
    _
  // Predicated region
  $region22: #{bert_forward.14} parent=0 // pred_check
    _
  $region23: #{bert_forward.14} parent=0 // pred_check_branch
    %22 = sbr.rel (0) target = $region25
  $region24: #{bert_forward.14} parent=0 // pred_region
    _
  $region25: #{bert_forward.14} parent=0 // pred_fallthru
    _
  %p24 = scmp.eq.s32.totalorder 0, 0
  // Predicated region
  $region26: #{bert_forward.14} parent=0 // pred_check
    %p25 = pneg %p24
  $region27: #{bert_forward.14} parent=0 // pred_check_branch
    %27 = sbr.rel (%p25) target = $region29
  $region28: #{bert_forward.14} parent=0 // pred_region
    %vm28 = vcmask 261120
    %29 = vst.msk [vmem:[#allocation2] sm:$0xff] %vm28, 0.0
    %30 = vst.msk [vmem:[#allocation2 + $0x8] sm:$0xff] %vm28, 0.0
  $region29: #{bert_forward.14} parent=0 // pred_fallthru
    _
  %v31 = vld [vmem:[#allocation2] sm:$0xff]
  %v32 = vld [vmem:[#allocation2 + $0x8] sm:$0xff]
  %v33 = vld [vmem:[%s0] sm:$0xff]
  %v34 = vld [vmem:[%s0 + $0x8] sm:$0xff]
  %v35 = vpack.c.bf16 %v34, %v33
  %v36 = vld [vmem:[%s1] sm:$0xff]
  %v37 = vld [vmem:[%s1 + $0x8] sm:$0xff]
  %v38 = vld [vmem:[%s1 + $0x10] sm:$0xff]
  %v39 = vld [vmem:[%s1 + $0x18] sm:$0xff]
  %v40 = vld [vmem:[%s1 + $0x20] sm:$0xff]
  %v41 = vld [vmem:[%s1 + $0x28] sm:$0xff]
  %v42 = vld [vmem:[%s1 + $0x30] sm:$0xff]
  %v43 = vld [vmem:[%s1 + $0x38] sm:$0xff]
  %v44 = vpack.c.bf16 %v37, %v36
  %v45 = vpack.c.bf16 %v39, %v38
  %v46 = vpack.c.bf16 %v41, %v40
  %v47 = vpack.c.bf16 %v43, %v42
  %vm48 = vcmask 523264
  %v50 = vsel %vm48, %v35, 0
  %52 = vmatprep.subr.bf16.mxu0 0
  %53 = vmatpush1.bf16.msra.mxu0 0
  %54 = vmatprep.subr.bf16.mxu0 0
  %55 = vmatpush1.bf16.msra.mxu0 0
  %56 = vmatprep.subr.bf16.mxu0 0
  %57 = vmatpush1.bf16.msra.mxu0 0
  %58 = vmatprep.subr.bf16.mxu0 0
  %59 = vmatpush1.bf16.msra.mxu0 0
  %60 = vmatprep.subr.bf16.mxu0 0
  %61 = vmatpush1.bf16.msra.mxu0 %v47
  %62 = vmatprep.subr.bf16.mxu0 0
  %63 = vmatpush1.bf16.msra.mxu0 %v46
  %64 = vmatprep.subr.bf16.mxu0 0
  %65 = vmatpush1.bf16.msra.mxu0 %v45
  %66 = vmatprep.subr.bf16.mxu0 0
  %67 = vmatpush1.bf16.msra.mxu0 %v44
  %68 = vmatprep.subr.bf16.mxu0 0
  %69 = vmatpush2.bf16.msra.mxu0 0
  %70 = vmatprep.subr.bf16.mxu0 0
  %71 = vmatpush2.bf16.msra.mxu0 0
  %72 = vmatprep.subr.bf16.mxu0 0
  %73 = vmatpush2.bf16.msra.mxu0 0
  %74 = vmatprep.subr.bf16.mxu0 0
  %75 = vmatpush2.bf16.msra.mxu0 0
  %76 = vmatprep.subr.bf16.mxu0 0
  %77 = vmatpush2.bf16.msra.mxu0 0
  %78 = vmatprep.subr.bf16.mxu0 0
  %79 = vmatpush2.bf16.msra.mxu0 0
  %80 = vmatprep.subr.bf16.mxu0 0
  %81 = vmatpush2.bf16.msra.mxu0 0
  %82 = vmatprep.subr.bf16.mxu0 0
  %83 = vmatpush2.bf16.msra.mxu0 0
  %84 = vmatprep.mubr.bf16.mxu0 0
  %85 = vmatmul.mubr.bf16.gmra.mxu0 %v50
  %v86 = vpop.f32.mrf.mxu0
  %v87 = vadd.f32 0.0, %v86
  %v88 = vpop.f32.mrf.mxu0
  %v89 = vpop.f32.mrf.mxu0
  %v90 = vadd.f32 0.0, %v89
  %v91 = vpop.f32.mrf.mxu0
  %92 = vdwg.mxu0
  %v93 = vadd.f32 %v31, %v87
  %v94 = vadd.f32 %v32, %v90
  %vm95 = vcmask 261120
  %96 = vst.msk [vmem:[#allocation2] sm:$0xff] %vm95, %v93
  %97 = vst.msk [vmem:[#allocation2 + $0x8] sm:$0xff] %vm95, %v94
  // Predicated region
  $region30: #{bert_forward.14} parent=0 // pred_check
    %p98 = pneg %p24
  $region31: #{bert_forward.14} parent=0 // pred_check_branch
    %100 = sbr.rel (%p98) target = $region33
  $region32: #{bert_forward.14} parent=0 // pred_region
    %v101 = vld [vmem:[#allocation2] sm:$0xff]
    %v102 = vld [vmem:[#allocation2 + $0x8] sm:$0xff]
    %v103 = vld [vmem:[%s2] sm:$0x1]
    %v105 = vlaneseq
    %v106 = vshrl.u32 %v105, 7
    %v107 = vsub.s32 0, %v106
    %v108 = vrot.slane %v103, %v107
    %v110 = vadd.f32 %v101, %v108
    %v111 = vadd.f32 %v102, %v108
    %v112 = vld [vmem:[%s3] sm:$0xff]
    %v113 = vld [vmem:[%s3 + $0x8] sm:$0xff]
    %v114 = vadd.f32 %v110, %v112
    %v115 = vadd.f32 %v111, %v113
    %v116 = vsel %vm95, %v114, 0.0
    %117 = vadd.xlane.f32.xlu0 %v116
    %v118 = vpop.xlane.xlu0 %117
    %v119 = vsel %vm95, %v115, 0.0
    %120 = vadd.xlane.f32.xlu0 %v119
    %v121 = vpop.xlane.xlu0 %120
    %v122 = vrcp.pop 32.0
    %v123 = vmul.f32 %v118, %v122
    %v124 = vmul.f32 %v121, %v122
    %v125 = vsub.f32 %v114, %v123
    %v126 = vsub.f32 %v115, %v124
    %v127 = vmul.f32 %v125, %v125
    %v128 = vmul.f32 %v126, %v126
    %v129 = vsel %vm95, %v127, 0.0
    %130 = vadd.xlane.f32.xlu0 %v129
    %v131 = vpop.xlane.xlu0 %130
    %v132 = vsel %vm95, %v128, 0.0
    %133 = vadd.xlane.f32.xlu0 %v132
    %v134 = vpop.xlane.xlu0 %133
    %v135 = vmul.f32 %v131, %v122
    %v136 = vmul.f32 %v134, %v122
    %v137 = vadd.f32 %v135, 1e-06
    %v138 = vadd.f32 %v136, 1e-06
    %v139 = vrsqrt.pop %v137
    %v140 = vrsqrt.pop %v138
    %v141 = vmul.f32 %v125, %v139
    %v142 = vmul.f32 %v126, %v140
    %v143 = vld [vmem:[%s4] sm:$0x1]
    %v145 = vlaneseq
    %v146 = vshrl.u32 %v145, 7
    %v147 = vsub.s32 0, %v146
    %v148 = vrot.slane %v143, %v147
    %v150 = vmul.f32 %v141, %v148
    %v151 = vmul.f32 %v142, %v148
    %v152 = vld [vmem:[%s5] sm:$0x1]
    %v154 = vlaneseq
    %v155 = vshrl.u32 %v154, 7
    %v156 = vsub.s32 0, %v155
    %v157 = vrot.slane %v152, %v156
    %v159 = vadd.f32 %v150, %v157
    %v160 = vadd.f32 %v151, %v157
    %161 = vst.msk [vmem:[%s6] sm:$0xff] %vm95, %v159
    %162 = vst.msk [vmem:[%s6 + $0x8] sm:$0xff] %vm95, %v160
  $region33: #{bert_forward.14} parent=0 // pred_fallthru
    _
  // Predicated region
  $region34: #{bert_forward.14} parent=0 // pred_check
    _
  $region35: #{bert_forward.14} parent=0 // pred_check_branch
    %164 = sbr.rel (0) target = $region37
  $region36: #{bert_forward.14} parent=0 // pred_region
    _
  $region37: #{bert_forward.14} parent=0 // pred_fallthru
    _
  // Predicated region
  $region38: #{bert_forward.14} parent=0 // pred_check
    _
  $region39: #{bert_forward.14} parent=0 // pred_check_branch
    %166 = sbr.rel (0) target = $region41
  $region40: #{bert_forward.14} parent=0 // pred_region
    _
  $region41: #{bert_forward.14} parent=0 // pred_fallthru
    _

// kernel: bert_forward.19
$region0: #{bert_forward.19}
  #allocation0 [shape = 'u32[]', space=smem, size = 0x4, offset = 0x4, fixed_abs, tag = 'smem constant byte address 0x4 - core index']
  #allocation1 [shape = 'u32[144,128]{1,0:T(1,128)}', space=vmem, size = 0x12000, scoped, tag = 'internal scratch']
  #allocation2 [shape = 'f32[16,32]{1,0:T(8,128)}', space=vmem, size = 0x2000, scoped, tag = 'scratch operand']
  %s0 = inlined_call_operand.vmem [shape: f32[16,64], index: 0, kind: input, shape index: {}]
  %s1 = inlined_call_operand.vmem [shape: f32[64,32], index: 1, kind: input, shape index: {}]
  %s2 = inlined_call_operand.vmem [shape: f32[1,32], index: 2, kind: input, shape index: {}]
  %s3 = inlined_call_operand.vmem [shape: f32[16,32], index: 3, kind: input, shape index: {}]
  %s4 = inlined_call_operand.vmem [shape: f32[1,32], index: 4, kind: input, shape index: {}]
  %s5 = inlined_call_operand.vmem [shape: f32[1,32], index: 5, kind: input, shape index: {}]
  %s6 = inlined_call_operand.hbm [shape: f32[16,32], index: 6, kind: output, shape index: {}]
  %s7 = sld [smem:[#allocation0]]
  $region42: #{bert_forward.19} parent=0
    _
  %s9 = ssub.s32 1, %s7
  %s10 = scalar_select 0, %s9, %s7
  $region1: #{bert_forward.19} parent=0
    #allocation3 [shape = 'u8[8192]{0}', space=vmem, size = 0x2000, scoped, tag = 'output window, operand 0, single buffered']
    #allocation4 [shape = 's32[1]{0}', space=sflag, size = 0x4, scoped, tag = 'scoped memory for bert_forward.19']
    %11 = vsyncpa [#allocation4], 0
    // Predicated region
    $region2: #{bert_forward.19} parent=1 // pred_check
      _
    $region3: #{bert_forward.19} parent=1 // pred_check_branch
      %13 = sbr.rel (0) target = $region5
    $region4: #{bert_forward.19} parent=1 // pred_region
      _
    $region5: #{bert_forward.19} parent=1 // pred_fallthru
      _
    // Predicated region
    $region6: #{bert_forward.19} parent=1 // pred_check
      _
    $region7: #{bert_forward.19} parent=1 // pred_check_branch
      %15 = sbr.rel (0) target = $region9
    $region8: #{bert_forward.19} parent=1 // pred_region
      _
    $region9: #{bert_forward.19} parent=1 // pred_fallthru
      _
    // Predicated region
    $region10: #{bert_forward.19} parent=1 // pred_check
      _
    $region11: #{bert_forward.19} parent=1 // pred_check_branch
      %17 = sbr.rel (0) target = $region13
    $region12: #{bert_forward.19} parent=1 // pred_region
      _
    $region13: #{bert_forward.19} parent=1 // pred_fallthru
      _
    // Predicated region
    $region14: #{bert_forward.19} parent=1 // pred_check
      _
    $region15: #{bert_forward.19} parent=1 // pred_check_branch
      %19 = sbr.rel (0) target = $region17
    $region16: #{bert_forward.19} parent=1 // pred_region
      _
    $region17: #{bert_forward.19} parent=1 // pred_fallthru
      _
    // Predicated region
    $region18: #{bert_forward.19} parent=1 // pred_check
      _
    $region19: #{bert_forward.19} parent=1 // pred_check_branch
      %21 = sbr.rel (0) target = $region21
    $region20: #{bert_forward.19} parent=1 // pred_region
      _
    $region21: #{bert_forward.19} parent=1 // pred_fallthru
      _
    // Predicated region
    $region22: #{bert_forward.19} parent=1 // pred_check
      _
    $region23: #{bert_forward.19} parent=1 // pred_check_branch
      %23 = sbr.rel (0) target = $region25
    $region24: #{bert_forward.19} parent=1 // pred_region
      _
    $region25: #{bert_forward.19} parent=1 // pred_fallthru
      _
    %p25 = scmp.eq.s32.totalorder 0, 0
    // Predicated region
    $region26: #{bert_forward.19} parent=1 // pred_check
      %p26 = pneg %p25
    $region27: #{bert_forward.19} parent=1 // pred_check_branch
      %28 = sbr.rel (%p26) target = $region29
    $region28: #{bert_forward.19} parent=1 // pred_region
      %vm29 = vcmask 261120
      %30 = vst.msk [vmem:[#allocation2] sm:$0xff] %vm29, 0.0
      %31 = vst.msk [vmem:[#allocation2 + $0x8] sm:$0xff] %vm29, 0.0
    $region29: #{bert_forward.19} parent=1 // pred_fallthru
      _
    %v32 = vld [vmem:[#allocation2] sm:$0xff]
    %v33 = vld [vmem:[#allocation2 + $0x8] sm:$0xff]
    %v34 = vld [vmem:[%s0] sm:$0xff]
    %v35 = vld [vmem:[%s0 + $0x8] sm:$0xff]
    %v36 = vpack.c.bf16 %v35, %v34
    %v37 = vld [vmem:[%s1] sm:$0xff]
    %v38 = vld [vmem:[%s1 + $0x8] sm:$0xff]
    %v39 = vld [vmem:[%s1 + $0x10] sm:$0xff]
    %v40 = vld [vmem:[%s1 + $0x18] sm:$0xff]
    %v41 = vld [vmem:[%s1 + $0x20] sm:$0xff]
    %v42 = vld [vmem:[%s1 + $0x28] sm:$0xff]
    %v43 = vld [vmem:[%s1 + $0x30] sm:$0xff]
    %v44 = vld [vmem:[%s1 + $0x38] sm:$0xff]
    %v45 = vpack.c.bf16 %v38, %v37
    %v46 = vpack.c.bf16 %v40, %v39
    %v47 = vpack.c.bf16 %v42, %v41
    %v48 = vpack.c.bf16 %v44, %v43
    %vm49 = vcmask 523264
    %v51 = vsel %vm49, %v36, 0
    %53 = vmatprep.subr.bf16.mxu0 0
    %54 = vmatpush1.bf16.msra.mxu0 0
    %55 = vmatprep.subr.bf16.mxu0 0
    %56 = vmatpush1.bf16.msra.mxu0 0
    %57 = vmatprep.subr.bf16.mxu0 0
    %58 = vmatpush1.bf16.msra.mxu0 0
    %59 = vmatprep.subr.bf16.mxu0 0
    %60 = vmatpush1.bf16.msra.mxu0 0
    %61 = vmatprep.subr.bf16.mxu0 0
    %62 = vmatpush1.bf16.msra.mxu0 %v48
    %63 = vmatprep.subr.bf16.mxu0 0
    %64 = vmatpush1.bf16.msra.mxu0 %v47
    %65 = vmatprep.subr.bf16.mxu0 0
    %66 = vmatpush1.bf16.msra.mxu0 %v46
    %67 = vmatprep.subr.bf16.mxu0 0
    %68 = vmatpush1.bf16.msra.mxu0 %v45
    %69 = vmatprep.subr.bf16.mxu0 0
    %70 = vmatpush2.bf16.msra.mxu0 0
    %71 = vmatprep.subr.bf16.mxu0 0
    %72 = vmatpush2.bf16.msra.mxu0 0
    %73 = vmatprep.subr.bf16.mxu0 0
    %74 = vmatpush2.bf16.msra.mxu0 0
    %75 = vmatprep.subr.bf16.mxu0 0
    %76 = vmatpush2.bf16.msra.mxu0 0
    %77 = vmatprep.subr.bf16.mxu0 0
    %78 = vmatpush2.bf16.msra.mxu0 0
    %79 = vmatprep.subr.bf16.mxu0 0
    %80 = vmatpush2.bf16.msra.mxu0 0
    %81 = vmatprep.subr.bf16.mxu0 0
    %82 = vmatpush2.bf16.msra.mxu0 0
    %83 = vmatprep.subr.bf16.mxu0 0
    %84 = vmatpush2.bf16.msra.mxu0 0
    %85 = vmatprep.mubr.bf16.mxu0 0
    %86 = vmatmul.mubr.bf16.gmra.mxu0 %v51
    %v87 = vpop.f32.mrf.mxu0
    %v88 = vadd.f32 0.0, %v87
    %v89 = vpop.f32.mrf.mxu0
    %v90 = vpop.f32.mrf.mxu0
    %v91 = vadd.f32 0.0, %v90
    %v92 = vpop.f32.mrf.mxu0
    %93 = vdwg.mxu0
    %v94 = vadd.f32 %v32, %v88
    %v95 = vadd.f32 %v33, %v91
    %vm96 = vcmask 261120
    %97 = vst.msk [vmem:[#allocation2] sm:$0xff] %vm96, %v94
    %98 = vst.msk [vmem:[#allocation2 + $0x8] sm:$0xff] %vm96, %v95
    // Predicated region
    $region30: #{bert_forward.19} parent=1 // pred_check
      %p99 = pneg %p25
    $region31: #{bert_forward.19} parent=1 // pred_check_branch
      %101 = sbr.rel (%p99) target = $region33
    $region32: #{bert_forward.19} parent=1 // pred_region
      %v102 = vld [vmem:[#allocation2] sm:$0xff]
      %v103 = vld [vmem:[#allocation2 + $0x8] sm:$0xff]
      %v104 = vld [vmem:[%s2] sm:$0x1]
      %v106 = vlaneseq
      %v107 = vshrl.u32 %v106, 7
      %v108 = vsub.s32 0, %v107
      %v109 = vrot.slane %v104, %v108
      %v111 = vadd.f32 %v102, %v109
      %v112 = vadd.f32 %v103, %v109
      %v113 = vld [vmem:[%s3] sm:$0xff]
      %v114 = vld [vmem:[%s3 + $0x8] sm:$0xff]
      %v115 = vadd.f32 %v111, %v113
      %v116 = vadd.f32 %v112, %v114
      %v117 = vsel %vm96, %v115, 0.0
      %118 = vadd.xlane.f32.xlu0 %v117
      %v119 = vpop.xlane.xlu0 %118
      %v120 = vsel %vm96, %v116, 0.0
      %121 = vadd.xlane.f32.xlu0 %v120
      %v122 = vpop.xlane.xlu0 %121
      %v123 = vrcp.pop 32.0
      %v124 = vmul.f32 %v119, %v123
      %v125 = vmul.f32 %v122, %v123
      %v126 = vsub.f32 %v115, %v124
      %v127 = vsub.f32 %v116, %v125
      %v128 = vmul.f32 %v126, %v126
      %v129 = vmul.f32 %v127, %v127
      %v130 = vsel %vm96, %v128, 0.0
      %131 = vadd.xlane.f32.xlu0 %v130
      %v132 = vpop.xlane.xlu0 %131
      %v133 = vsel %vm96, %v129, 0.0
      %134 = vadd.xlane.f32.xlu0 %v133
      %v135 = vpop.xlane.xlu0 %134
      %v136 = vmul.f32 %v132, %v123
      %v137 = vmul.f32 %v135, %v123
      %v138 = vadd.f32 %v136, 1e-06
      %v139 = vadd.f32 %v137, 1e-06
      %v140 = vrsqrt.pop %v138
      %v141 = vrsqrt.pop %v139
      %v142 = vmul.f32 %v126, %v140
      %v143 = vmul.f32 %v127, %v141
      %v144 = vld [vmem:[%s4] sm:$0x1]
      %v146 = vlaneseq
      %v147 = vshrl.u32 %v146, 7
      %v148 = vsub.s32 0, %v147
      %v149 = vrot.slane %v144, %v148
      %v151 = vmul.f32 %v142, %v149
      %v152 = vmul.f32 %v143, %v149
      %v153 = vld [vmem:[%s5] sm:$0x1]
      %v155 = vlaneseq
      %v156 = vshrl.u32 %v155, 7
      %v157 = vsub.s32 0, %v156
      %v158 = vrot.slane %v153, %v157
      %v160 = vadd.f32 %v151, %v158
      %v161 = vadd.f32 %v152, %v158
      %162 = vst.msk [vmem:[#allocation3] sm:$0xff] %vm96, %v160
      %163 = vst.msk [vmem:[#allocation3 + $0x8] sm:$0xff] %vm96, %v161
    $region33: #{bert_forward.19} parent=1 // pred_fallthru
      _
    // Predicated region
    $region34: #{bert_forward.19} parent=1 // pred_check
      _
    $region35: #{bert_forward.19} parent=1 // pred_check_branch
      %165 = sbr.rel (0) target = $region37
    $region36: #{bert_forward.19} parent=1 // pred_region
      %s167 = ssub.s32 256, 256
      %168 = vsyncadd [#allocation4], %s167
      %s169 = sshll.u32 [#allocation3], 4
      %s170 = int_to_ptr.vmem [resolvable:$true] %s169
      %175 = dma.vmem_to_hbm [thread:$0]  %s170, 256, %s6, [#allocation4], 128, 128, 8
    $region37: #{bert_forward.19} parent=1 // pred_fallthru
      _
    // Predicated region
    $region38: #{bert_forward.19} parent=1 // pred_check
      _
    $region39: #{bert_forward.19} parent=1 // pred_check_branch
      %177 = sbr.rel (0) target = $region41
    $region40: #{bert_forward.19} parent=1 // pred_region
      %178 = dma.done [#allocation4], 256
    $region41: #{bert_forward.19} parent=1 // pred_fallthru
      _
    %179 = vsyncpa [#allocation4], 1

</llo_original>
